<compile_context>
chip_gen: v5e
topology: v5e:2x2
jax: 0.10.0
libtpu: 0.0.40
codegen_flags: <defaults>
</compile_context>

<pallas_src>
import math
import functools

import jax
import jax.numpy as jnp
from jax import lax
from jax.experimental import pallas as pl
from jax.experimental.pallas import tpu as pltpu


# ----------------------------------------------------------------------------
# Shared in-kernel helpers (all operate on a fused (Ctot, Ckv) score map).
# ----------------------------------------------------------------------------
def _instance_norm_rows(attn, channel_splits, eps=1e-5):
    """Per-scale nn.InstanceNorm2d(1, affine=False) over the fused score map.

    Instead of slice + per-slice mean/var + concat, do 2 full cross-lane
    reductions (row sum / row sum-of-squares), tiny per-scale column
    reductions, and apply the result as a single per-row scale/shift.
    Variance is biased (E[x^2] - E[x]^2), matching nn.InstanceNorm2d.
    """
    ctot, ckv = attn.shape
    row_sum = jnp.sum(attn, axis=-1, keepdims=True)            # (Ctot, 1)
    row_sq = jnp.sum(attn * attn, axis=-1, keepdims=True)      # (Ctot, 1)
    rows = lax.broadcasted_iota(jnp.int32, (ctot, 1), 0)
    mu_col = jnp.zeros((ctot, 1), jnp.float32)
    rstd_col = jnp.zeros((ctot, 1), jnp.float32)
    off = 0
    for c in channel_splits:
        mask = ((rows >= off) & (rows < off + c)).astype(jnp.float32)
        cnt = float(c * ckv)
        mu = jnp.sum(row_sum * mask) / cnt
        var = jnp.maximum(jnp.sum(row_sq * mask) / cnt - mu * mu, 0.0)
        rstd = lax.rsqrt(var + eps)
        mu_col = mu_col + mask * mu
        rstd_col = rstd_col + mask * rstd
        off += c
    return (attn - mu_col) * rstd_col


def _softmax_project(a, w_bf16):
    """Row softmax over the KV axis, then the reassociated projection
    probs_proj = w_bd @ probs (done before touching the full-N value panel)."""
    a = a - jnp.max(a, axis=-1, keepdims=True)
    e = jnp.exp(a)
    probs = e * pl.reciprocal(jnp.sum(e, axis=-1, keepdims=True), approx=True)
    return jnp.dot(w_bf16, probs.astype(jnp.bfloat16),
                   preferred_element_type=jnp.float32)          # (Ctot, Ckv)


def _vmem_limit_bytes(per_step_block_bytes):
    # 2x for double-buffered pipeline blocks + fixed headroom for in-kernel
    # f32 temporaries / spill; clamped to v7x's 64 MiB physical VMEM.
    return int(min(2 * per_step_block_bytes + (12 << 20), 64 << 20))


# ----------------------------------------------------------------------------
# Path 1: fully fused single-launch kernel (small N: whole panels fit VMEM).
#   q_cat: (Ctot, N) f32, k: (Ckv, N) f32, v: (Ckv, N) bf16,
#   w_bd: (Ctot, Ctot) bf16 block-diag project_out  ->  out: (Ctot, N) f32
# ----------------------------------------------------------------------------
def _fused_attn_kernel(q_ref, k_ref, v_ref, w_ref, o_ref, *,
                       channel_splits, kv_size):
    q = q_ref[...]                                             # (Ctot, N) f32
    k = k_ref[...]                                             # (Ckv,  N) f32

    # torch.nn.functional.normalize(dim=-1): x / max(||x||, 1e-12).
    # rsqrt(max(ss, 1e-24)) == 1 / max(sqrt(ss), 1e-12); runs on the EUP.
    # The 1/sqrt(KV_size) attention scale is folded into qn (free).
    inv_sqrt_kv = 1.0 / math.sqrt(kv_size)
    q_ss = jnp.sum(q * q, axis=-1, keepdims=True)
    k_ss = jnp.sum(k * k, axis=-1, keepdims=True)
    qn = q * (lax.rsqrt(jnp.maximum(q_ss, 1e-24)) * inv_sqrt_kv)
    kn = k * lax.rsqrt(jnp.maximum(k_ss, 1e-24))

    # attn = qn @ kn^T -> (Ctot, Ckv); bf16 operands, f32 MXU accumulation.
    attn = lax.dot_general(qn.astype(jnp.bfloat16), kn.astype(jnp.bfloat16),
                           (((1,), (1,)), ((), ())),
                           preferred_element_type=jnp.float32)

    a = _instance_norm_rows(attn, channel_splits)
    probs_proj = _softmax_project(a, w_ref[...])               # (Ctot, Ckv) f32

    # v (already bf16) is loaded only now: not live across the norm/softmax
    # phase, cutting peak vreg pressure / spills.
    out = jnp.dot(probs_proj.astype(jnp.bfloat16), v_ref[...],
                  preferred_element_type=jnp.float32)          # (Ctot, N)
    o_ref[...] = out.astype(o_ref.dtype)


def fused_attention_core(q_cat, k, v, w_bd, channel_num, kv_size):
    """q_cat: (B, Ctot, N), k/v: (B, Ckv, N), w_bd: (Ctot, Ctot) -> (B, Ctot, N)."""
    B, Ctot, N = q_cat.shape
    Ckv = k.shape[1]
    v_bf = v.astype(jnp.bfloat16)
    w_bf = w_bd.astype(jnp.bfloat16)
    block_bytes = (4 * Ctot * N + 4 * Ckv * N + 2 * Ckv * N
                   + 2 * Ctot * Ctot + 4 * Ctot * N)
    kernel = functools.partial(_fused_attn_kernel,
                               channel_splits=tuple(channel_num),
                               kv_size=kv_size)
    # TODO(synk): if B == 1 in deployment, add a second parallel grid axis so
    # the second v7x TensorCore is not idle (split N or the scale groups).
    return pl.pallas_call(
        kernel,
        out_shape=jax.ShapeDtypeStruct((B, Ctot, N), jnp.float32),
        grid_spec=pltpu.PrefetchScalarGridSpec(
            num_scalar_prefetch=0,
            grid=(B,),
            in_specs=[
                pl.BlockSpec((None, Ctot, N), lambda b: (b, 0, 0)),
                pl.BlockSpec((None, Ckv, N), lambda b: (b, 0, 0)),
                pl.BlockSpec((None, Ckv, N), lambda b: (b, 0, 0)),
                pl.BlockSpec((Ctot, Ctot), lambda b: (0, 0)),
            ],
            out_specs=pl.BlockSpec((None, Ctot, N), lambda b: (b, 0, 0)),
        ),
        compiler_params=pltpu.CompilerParams(
            dimension_semantics=("parallel",),
            vmem_limit_bytes=_vmem_limit_bytes(block_bytes)),
    )(q_cat, k, v_bf, w_bf)


# ----------------------------------------------------------------------------
# Path 2: two-phase N-tiled path (bounded VMEM footprint for production N).
# ----------------------------------------------------------------------------
def _scores_kernel(q_ref, k_ref, w_ref, p_ref, s_acc, qss_acc, kss_acc, *,
                   channel_splits, kv_size):
    n = pl.program_id(1)

    @pl.when(n == 0)
    def _():
        s_acc[...] = jnp.zeros_like(s_acc)
        qss_acc[...] = jnp.zeros_like(qss_acc)
        kss_acc[...] = jnp.zeros_like(kss_acc)

    q = q_ref[...]                                             # (Ctot, tn) f32
    k = k_ref[...]                                             # (Ckv,  tn) f32
    s_acc[...] += lax.dot_general(q.astype(jnp.bfloat16), k.astype(jnp.bfloat16),
                                  (((1,), (1,)), ((), ())),
                                  preferred_element_type=jnp.float32)
    qss_acc[...] += jnp.sum(q * q, axis=-1, keepdims=True)
    kss_acc[...] += jnp.sum(k * k, axis=-1, keepdims=True)

    @pl.when(n == pl.num_programs(1) - 1)
    def _():
        inv_sqrt_kv = 1.0 / math.sqrt(kv_size)
        q_inv = lax.rsqrt(jnp.maximum(qss_acc[...], 1e-24)) * inv_sqrt_kv  # (Ctot,1)
        k_inv = lax.rsqrt(jnp.maximum(kss_acc[...], 1e-24))                # (Ckv, 1)
        # Rank-1 scale map q_inv @ k_inv^T applied to the raw score sums:
        # equivalent to normalizing q/k rows before the matmul.
        scale = lax.dot_general(q_inv, k_inv, (((1,), (1,)), ((), ())),
                                preferred_element_type=jnp.float32)        # (Ctot,Ckv)
        attn = s_acc[...] * scale
        a = _instance_norm_rows(attn, channel_splits)
        p_ref[...] = _softmax_project(a, w_ref[...]).astype(p_ref.dtype)


def _pv_kernel(p_ref, v_ref, o_ref):
    o_ref[...] = jnp.dot(p_ref[...], v_ref[...],
                         preferred_element_type=jnp.float32).astype(o_ref.dtype)


def tiled_attention_core(q_cat, k, v, w_bd, channel_num, kv_size, tile_n=512):
    B, Ctot, N = q_cat.shape
    Ckv = k.shape[1]
    tn = min(tile_n, N)
    assert N % tn == 0 and tn % 128 == 0, "tile_n must divide N, multiple of 128"
    nt = N // tn
    v_bf = v.astype(jnp.bfloat16)
    w_bf = w_bd.astype(jnp.bfloat16)

    # Phase A: accumulate scores over N tiles, finalize probs_proj (bf16).
    a_block_bytes = 4 * Ctot * tn + 4 * Ckv * tn + 2 * Ctot * Ctot + 2 * Ctot * Ckv
    scores_kernel = functools.partial(_scores_kernel,
                                      channel_splits=tuple(channel_num),
                                      kv_size=kv_size)
    probs_proj = pl.pallas_call(
        scores_kernel,
        out_shape=jax.ShapeDtypeStruct((B, Ctot, Ckv), jnp.bfloat16),
        grid_spec=pltpu.PrefetchScalarGridSpec(
            num_scalar_prefetch=0,
            grid=(B, nt),
            in_specs=[
                pl.BlockSpec((None, Ctot, tn), lambda b, n: (b, 0, n)),
                pl.BlockSpec((None, Ckv, tn), lambda b, n: (b, 0, n)),
                pl.BlockSpec((Ctot, Ctot), lambda b, n: (0, 0)),
            ],
            out_specs=pl.BlockSpec((None, Ctot, Ckv), lambda b, n: (b, 0, 0)),
            scratch_shapes=[
                pltpu.VMEM((Ctot, Ckv), jnp.float32),
                pltpu.VMEM((Ctot, 1), jnp.float32),
                pltpu.VMEM((Ckv, 1), jnp.float32),
            ]),
        compiler_params=pltpu.CompilerParams(
            dimension_semantics=("parallel", "arbitrary"),
            vmem_limit_bytes=_vmem_limit_bytes(a_block_bytes)),
    )(q_cat, k, w_bf)

    # Phase B: stream v tiles, out_tile = probs_proj @ v_tile (lane-dense).
    b_block_bytes = 2 * Ctot * Ckv + 2 * Ckv * tn + 4 * Ctot * tn
    out = pl.pallas_call(
        _pv_kernel,
        out_shape=jax.ShapeDtypeStruct((B, Ctot, N), jnp.float32),
        grid_spec=pltpu.PrefetchScalarGridSpec(
            num_scalar_prefetch=0,
            grid=(B, nt),
            in_specs=[
                pl.BlockSpec((None, Ctot, Ckv), lambda b, n: (b, 0, 0)),
                pl.BlockSpec((None, Ckv, tn), lambda b, n: (b, 0, n)),
            ],
            out_specs=pl.BlockSpec((None, Ctot, tn), lambda b, n: (b, 0, n)),
        ),
        compiler_params=pltpu.CompilerParams(
            dimension_semantics=("parallel", "parallel"),
            vmem_limit_bytes=_vmem_limit_bytes(b_block_bytes)),
    )(probs_proj, v_bf)
    return out


# ----------------------------------------------------------------------------
# Dispatch: single fused launch when the full panels fit the VMEM budget,
# otherwise the two-phase N-tiled path (also the safe choice for v7x's
# smaller 64 MiB physical VMEM at production spatial sizes).
# ----------------------------------------------------------------------------
_FUSED_VMEM_BUDGET = 20 * 1024 * 1024


def attention_core(q_cat, k, v, w_bd, channel_num, kv_size):
    B, Ctot, N = q_cat.shape
    Ckv = k.shape[1]
    # double-buffered pipeline blocks + f32 in-kernel temporaries.
    fused_bytes = 2 * (4 * Ctot * N + 4 * Ckv * N + 2 * Ckv * N
                       + 2 * Ctot * Ctot + 4 * Ctot * N)
    fused_bytes += 4 * (2 * Ctot * Ckv + Ctot * N + Ckv * N)
    if fused_bytes <= _FUSED_VMEM_BUDGET:
        return fused_attention_core(q_cat, k, v, w_bd, channel_num, kv_size)
    for tn in (512, 384, 256, 128):
        if N % tn == 0:
            return tiled_attention_core(q_cat, k, v, w_bd, channel_num,
                                        kv_size, tile_n=tn)
    # TODO(synk): pad/mask the N axis in the tiled path when N % 128 != 0.
    return fused_attention_core(q_cat, k, v, w_bd, channel_num, kv_size)


# ----------------------------------------------------------------------------
# Pure-JAX reference for the fused core (correctness check only; per-scale,
# matching the original PyTorch math exactly in f32).
# ----------------------------------------------------------------------------
def fused_attention_core_ref(q_cat, k, v, w_bd, channel_num, kv_size):
    kn = k / jnp.maximum(jnp.linalg.norm(k, axis=-1, keepdims=True), 1e-12)
    outs = []
    off = 0
    for c in channel_num:
        q = q_cat[:, off:off + c, :]
        qn = q / jnp.maximum(jnp.linalg.norm(q, axis=-1, keepdims=True), 1e-12)
        attn = jnp.einsum("bcn,bdn->bcd", qn, kn) / math.sqrt(kv_size)
        mu = jnp.mean(attn, axis=(1, 2), keepdims=True)
        var = jnp.mean((attn - mu) ** 2, axis=(1, 2), keepdims=True)
        a = (attn - mu) / jnp.sqrt(var + 1e-5)
        probs = jax.nn.softmax(a, axis=-1)
        outs.append(jnp.einsum("bcd,bdn->bcn", probs, v))
        off += c
    out = jnp.concatenate(outs, axis=1)
    return jnp.einsum("oc,bcn->bon", w_bd, out)


# ----------------------------------------------------------------------------
# Plain-JAX glue: 1x1 conv (channel matmul) and 3x3 grouped conv, NCHW.
# (Spatial convs precede the attention core, so they cannot be fused into it.)
# ----------------------------------------------------------------------------
def conv1x1(x, w):
    # x: (B, Cin, H, W), w: (Cout, Cin)
    return jnp.einsum("oc,bchw->bohw", w, x)


def conv3x3_grouped(x, w, groups):
    # x: (B, Cin, H, W), w: (Cout, Cin//groups, 3, 3), padding=1, no bias
    return lax.conv_general_dilated(
        x, w, window_strides=(1, 1), padding=((1, 1), (1, 1)),
        dimension_numbers=("NCHW", "OIHW", "NCHW"),
        feature_group_count=groups)


# ----------------------------------------------------------------------------
# Full Attention_org forward (num_attention_heads = 1).
# Note: the q*_attn* scalar Parameters, self.vis and dropout are unused in the
# PyTorch forward, so they are omitted here.
# ----------------------------------------------------------------------------
def attention_org_forward(params, channel_num, kv_size,
                          emb1, emb2, emb3, emb4, emb_all,
                          core_fn=attention_core):
    embs = (emb1, emb2, emb3, emb4)
    B, _, H, Wd = emb1.shape
    N = H * Wd

    # k = self.k(self.mheadk(emb_all)); v = self.v(self.mheadv(emb_all))
    k = conv3x3_grouped(conv1x1(emb_all, params["mheadk"]), params["k"], kv_size)
    v = conv3x3_grouped(conv1x1(emb_all, params["mheadv"]), params["v"], kv_size)
    k = k.reshape(B, kv_size, N)
    v = v.reshape(B, kv_size, N)

    # q_i = self.q_i(self.mhead_i(emb_i)); fuse all scales along channels.
    qs = []
    for i, e in enumerate(embs, start=1):
        c = channel_num[i - 1]
        q = conv3x3_grouped(conv1x1(e, params[f"mhead{i}"]),
                            params[f"q{i}"], c // 2)
        qs.append(q.reshape(B, c, N))
    q_cat = jnp.concatenate(qs, axis=1)                    # (B, Ctot, N)

    # Per-scale project_out 1x1 convs as one block-diagonal weight.
    w_bd = jax.scipy.linalg.block_diag(
        *(params[f"proj{i}"] for i in range(1, 5)))        # (Ctot, Ctot)

    o = core_fn(q_cat, k, v, w_bd, channel_num, kv_size)   # Pallas hot path

    outs = []
    off = 0
    for c in channel_num:
        outs.append(o[:, off:off + c, :].reshape(B, c, H, Wd))
        off += c
    weights = None
    return (*outs, weights)


# ----------------------------------------------------------------------------
# Deterministic parameter init (shapes follow the module's __init__).
# ----------------------------------------------------------------------------
def init_params(key, channel_num, kv_size):
    keys = iter(jax.random.split(key, 3 * len(channel_num) + 4))
    p = {}
    for i, c in enumerate(channel_num, start=1):
        p[f"mhead{i}"] = 0.1 * jax.random.normal(next(keys), (c, c), jnp.float32)
        # q_i: 3x3 conv, groups = c//2 -> weight (c, 2, 3, 3)
        p[f"q{i}"] = 0.1 * jax.random.normal(next(keys), (c, 2, 3, 3), jnp.float32)
        p[f"proj{i}"] = 0.1 * jax.random.normal(next(keys), (c, c), jnp.float32)
    p["mheadk"] = 0.05 * jax.random.normal(next(keys), (kv_size, kv_size), jnp.float32)
    p["mheadv"] = 0.05 * jax.random.normal(next(keys), (kv_size, kv_size), jnp.float32)
    # k, v: depthwise 3x3 (groups = kv_size) -> weight (kv_size, 1, 3, 3)
    p["k"] = 0.1 * jax.random.normal(next(keys), (kv_size, 1, 3, 3), jnp.float32)
    p["v"] = 0.1 * jax.random.normal(next(keys), (kv_size, 1, 3, 3), jnp.float32)
    return p


if __name__ == "__main__":
    channel_num = [8, 16, 24, 32]       # small per-scale channel counts
    kv_size = sum(channel_num)          # 80 (SCTransNet: KV_size = sum of scales)
    B, H, W = 2, 16, 16                 # N = 256 -> lane-dense (2 x 128 lanes)

    root = jax.random.PRNGKey(0)
    kp, k1, k2, k3, k4, k5 = jax.random.split(root, 6)
    params = init_params(kp, channel_num, kv_size)

    emb1 = jax.random.normal(k1, (B, channel_num[0], H, W), jnp.float32)
    emb2 = jax.random.normal(k2, (B, channel_num[1], H, W), jnp.float32)
    emb3 = jax.random.normal(k3, (B, channel_num[2], H, W), jnp.float32)
    emb4 = jax.random.normal(k4, (B, channel_num[3], H, W), jnp.float32)
    emb_all = jax.random.normal(k5, (B, kv_size, H, W), jnp.float32)

    # Default (auto) path: fused single-launch kernel at this size.
    O1, O2, O3, O4, weights = attention_org_forward(
        params, channel_num, kv_size, emb1, emb2, emb3, emb4, emb_all)
    jax.block_until_ready((O1, O2, O3, O4))

    # Pure-JAX (f32, unfused) reference forward pass.
    R1, R2, R3, R4, _ = attention_org_forward(
        params, channel_num, kv_size, emb1, emb2, emb3, emb4, emb_all,
        core_fn=fused_attention_core_ref)
    jax.block_until_ready((R1, R2, R3, R4))
    for o, r in ((O1, R1), (O2, R2), (O3, R3), (O4, R4)):
        assert o.shape == r.shape
        assert jnp.max(jnp.abs(o - r)) < 2e-2, "fused Pallas kernel mismatch"

    # Also exercise the two-phase N-tiled path (2 tiles of 128 lanes here)
    # and check it against the same reference.
    tiled_core = functools.partial(tiled_attention_core, tile_n=128)
    T1, T2, T3, T4, _ = attention_org_forward(
        params, channel_num, kv_size, emb1, emb2, emb3, emb4, emb_all,
        core_fn=tiled_core)
    jax.block_until_ready((T1, T2, T3, T4))
    for t, r in ((T1, R1), (T2, R2), (T3, R3), (T4, R4)):
        assert jnp.max(jnp.abs(t - r)) < 2e-2, "tiled Pallas kernel mismatch"

    assert O1.shape == (B, channel_num[0], H, W)
    assert O2.shape == (B, channel_num[1], H, W)
    assert O3.shape == (B, channel_num[2], H, W)
    assert O4.shape == (B, channel_num[3], H, W)
    assert weights is None

    print("KERNEL_OK")
</pallas_src>

<mosaic_0001>
module attributes {stable_mosaic.version = 11 : i64} {
  func.func @_fused_attn_kernel(%arg0: i32, %arg1: memref<1x80x256xf32, #tpu.memory_space<vmem>>, %arg2: memref<1x80x256xf32, #tpu.memory_space<vmem>>, %arg3: memref<1x80x256xbf16, #tpu.memory_space<vmem>>, %arg4: memref<80x80xbf16, #tpu.memory_space<vmem>>, %arg5: memref<1x80x256xf32, #tpu.memory_space<vmem>>) attributes {dimension_semantics = [#tpu.dimension_semantics<parallel>], iteration_bounds = array<i64: 2>, scalar_prefetch = 0 : i64, scratch_operands = 0 : i64, tpu.core_type = #tpu.core_type<tc>, window_params = [{transform_indices = @transform_0, window_bounds = array<i64: 1, 80, 256>}, {transform_indices = @transform_1, window_bounds = array<i64: 1, 80, 256>}, {transform_indices = @transform_2, window_bounds = array<i64: 1, 80, 256>}, {pipeline_mode = #tpu.pipeline_mode<synchronous>, transform_indices = @transform_3, window_bounds = array<i64: 80, 80>}, {transform_indices = @transform_4, window_bounds = array<i64: 1, 80, 256>}]} {
    %c0 = arith.constant 0 : index
    %c0_0 = arith.constant 0 : index
    %c0_1 = arith.constant 0 : index
    %0 = vector.load %arg1[%c0, %c0_0, %c0_1] : memref<1x80x256xf32, #tpu.memory_space<vmem>>, vector<1x80x256xf32>
    %1 = vector.shape_cast %0 : vector<1x80x256xf32> to vector<80x256xf32>
    %c0_2 = arith.constant 0 : index
    %c0_3 = arith.constant 0 : index
    %c0_4 = arith.constant 0 : index
    %2 = vector.load %arg2[%c0_2, %c0_3, %c0_4] : memref<1x80x256xf32, #tpu.memory_space<vmem>>, vector<1x80x256xf32>
    %3 = vector.shape_cast %2 : vector<1x80x256xf32> to vector<80x256xf32>
    %4 = arith.mulf %1, %1 : vector<80x256xf32>
    %cst = arith.constant dense<0.000000e+00> : vector<80xf32>
    %5 = vector.multi_reduction <add>, %4, %cst [1] : vector<80x256xf32> to vector<80xf32>
    %6 = vector.shape_cast %5 : vector<80xf32> to vector<80x1xf32>
    %7 = arith.mulf %3, %3 : vector<80x256xf32>
    %cst_5 = arith.constant dense<0.000000e+00> : vector<80xf32>
    %8 = vector.multi_reduction <add>, %7, %cst_5 [1] : vector<80x256xf32> to vector<80xf32>
    %9 = vector.shape_cast %8 : vector<80xf32> to vector<80x1xf32>
    %cst_6 = arith.constant 1.000000e-24 : f32
    %10 = vector.broadcast %cst_6 : f32 to vector<80x1xf32>
    %11 = arith.maximumf %6, %10 : vector<80x1xf32>
    %12 = math.rsqrt %11 : vector<80x1xf32>
    %cst_7 = arith.constant 0.111803398 : f32
    %13 = vector.broadcast %cst_7 : f32 to vector<80x1xf32>
    %14 = arith.mulf %12, %13 : vector<80x1xf32>
    %15 = vector.broadcast %14 : vector<80x1xf32> to vector<80x256xf32>
    %16 = arith.mulf %1, %15 : vector<80x256xf32>
    %cst_8 = arith.constant 1.000000e-24 : f32
    %17 = vector.broadcast %cst_8 : f32 to vector<80x1xf32>
    %18 = arith.maximumf %9, %17 : vector<80x1xf32>
    %19 = math.rsqrt %18 : vector<80x1xf32>
    %20 = vector.broadcast %19 : vector<80x1xf32> to vector<80x256xf32>
    %21 = arith.mulf %3, %20 : vector<80x256xf32>
    %22 = arith.truncf %16 : vector<80x256xf32> to vector<80x256xbf16>
    %23 = arith.truncf %21 : vector<80x256xf32> to vector<80x256xbf16>
    %cst_9 = arith.constant dense<0.000000e+00> : vector<80x80xf32>
    %24 = tpu.matmul %22, %23, %cst_9 {dimension_numbers = #tpu.dot_dimension_numbers<[1], [1], [0], [0], [0, 0, 1, 0], [], []>} : vector<80x256xbf16>, vector<80x256xbf16>, vector<80x80xf32> -> vector<80x80xf32>
    %cst_10 = arith.constant dense<0.000000e+00> : vector<80xf32>
    %25 = vector.multi_reduction <add>, %24, %cst_10 [1] : vector<80x80xf32> to vector<80xf32>
    %26 = vector.shape_cast %25 : vector<80xf32> to vector<80x1xf32>
    %27 = arith.mulf %24, %24 : vector<80x80xf32>
    %cst_11 = arith.constant dense<0.000000e+00> : vector<80xf32>
    %28 = vector.multi_reduction <add>, %27, %cst_11 [1] : vector<80x80xf32> to vector<80xf32>
    %29 = vector.shape_cast %28 : vector<80xf32> to vector<80x1xf32>
    %30 = tpu.iota {dimensions = array<i32: 0>} : vector<80x1xi32>
    %cst_12 = arith.constant 0.000000e+00 : f32
    %31 = vector.broadcast %cst_12 : f32 to vector<80x1xf32>
    %cst_13 = arith.constant 0.000000e+00 : f32
    %32 = vector.broadcast %cst_13 : f32 to vector<80x1xf32>
    %c0_i32 = arith.constant 0 : i32
    %33 = vector.broadcast %c0_i32 : i32 to vector<80x1xi32>
    %34 = arith.cmpi sge, %30, %33 : vector<80x1xi32>
    %c8_i32 = arith.constant 8 : i32
    %35 = vector.broadcast %c8_i32 : i32 to vector<80x1xi32>
    %36 = arith.cmpi slt, %30, %35 : vector<80x1xi32>
    %37 = arith.andi %34, %36 : vector<80x1xi1>
    %38 = arith.extui %37 : vector<80x1xi1> to vector<80x1xi32>
    %39 = arith.sitofp %38 : vector<80x1xi32> to vector<80x1xf32>
    %40 = arith.mulf %26, %39 : vector<80x1xf32>
    %41 = vector.shape_cast %40 : vector<80x1xf32> to vector<1x80x1xf32>
    %cst_14 = arith.constant dense<0.000000e+00> : vector<1xf32>
    %42 = vector.multi_reduction <add>, %41, %cst_14 [1, 2] : vector<1x80x1xf32> to vector<1xf32>
    %43 = vector.shape_cast %42 : vector<1xf32> to vector<1x1x1xf32>
    %44 = vector.extract %43[0, 0, 0] : f32 from vector<1x1x1xf32>
    %cst_15 = arith.constant 6.400000e+02 : f32
    %45 = arith.divf %44, %cst_15 : f32
    %46 = arith.mulf %29, %39 : vector<80x1xf32>
    %47 = vector.shape_cast %46 : vector<80x1xf32> to vector<1x80x1xf32>
    %cst_16 = arith.constant dense<0.000000e+00> : vector<1xf32>
    %48 = vector.multi_reduction <add>, %47, %cst_16 [1, 2] : vector<1x80x1xf32> to vector<1xf32>
    %49 = vector.shape_cast %48 : vector<1xf32> to vector<1x1x1xf32>
    %50 = vector.extract %49[0, 0, 0] : f32 from vector<1x1x1xf32>
    %cst_17 = arith.constant 6.400000e+02 : f32
    %51 = arith.divf %50, %cst_17 : f32
    %52 = arith.mulf %45, %45 : f32
    %53 = arith.subf %51, %52 : f32
    %cst_18 = arith.constant 0.000000e+00 : f32
    %54 = arith.maximumf %53, %cst_18 : f32
    %cst_19 = arith.constant 9.99999974E-6 : f32
    %55 = arith.addf %54, %cst_19 : f32
    %56 = math.rsqrt %55 : f32
    %57 = vector.broadcast %45 : f32 to vector<80x1xf32>
    %58 = arith.mulf %39, %57 : vector<80x1xf32>
    %59 = arith.addf %31, %58 : vector<80x1xf32>
    %60 = vector.broadcast %56 : f32 to vector<80x1xf32>
    %61 = arith.mulf %39, %60 : vector<80x1xf32>
    %62 = arith.addf %32, %61 : vector<80x1xf32>
    %c8_i32_20 = arith.constant 8 : i32
    %63 = vector.broadcast %c8_i32_20 : i32 to vector<80x1xi32>
    %64 = arith.cmpi sge, %30, %63 : vector<80x1xi32>
    %c24_i32 = arith.constant 24 : i32
    %65 = vector.broadcast %c24_i32 : i32 to vector<80x1xi32>
    %66 = arith.cmpi slt, %30, %65 : vector<80x1xi32>
    %67 = arith.andi %64, %66 : vector<80x1xi1>
    %68 = arith.extui %67 : vector<80x1xi1> to vector<80x1xi32>
    %69 = arith.sitofp %68 : vector<80x1xi32> to vector<80x1xf32>
    %70 = arith.mulf %26, %69 : vector<80x1xf32>
    %71 = vector.shape_cast %70 : vector<80x1xf32> to vector<1x80x1xf32>
    %cst_21 = arith.constant dense<0.000000e+00> : vector<1xf32>
    %72 = vector.multi_reduction <add>, %71, %cst_21 [1, 2] : vector<1x80x1xf32> to vector<1xf32>
    %73 = vector.shape_cast %72 : vector<1xf32> to vector<1x1x1xf32>
    %74 = vector.extract %73[0, 0, 0] : f32 from vector<1x1x1xf32>
    %cst_22 = arith.constant 1.280000e+03 : f32
    %75 = arith.divf %74, %cst_22 : f32
    %76 = arith.mulf %29, %69 : vector<80x1xf32>
    %77 = vector.shape_cast %76 : vector<80x1xf32> to vector<1x80x1xf32>
    %cst_23 = arith.constant dense<0.000000e+00> : vector<1xf32>
    %78 = vector.multi_reduction <add>, %77, %cst_23 [1, 2] : vector<1x80x1xf32> to vector<1xf32>
    %79 = vector.shape_cast %78 : vector<1xf32> to vector<1x1x1xf32>
    %80 = vector.extract %79[0, 0, 0] : f32 from vector<1x1x1xf32>
    %cst_24 = arith.constant 1.280000e+03 : f32
    %81 = arith.divf %80, %cst_24 : f32
    %82 = arith.mulf %75, %75 : f32
    %83 = arith.subf %81, %82 : f32
    %cst_25 = arith.constant 0.000000e+00 : f32
    %84 = arith.maximumf %83, %cst_25 : f32
    %cst_26 = arith.constant 9.99999974E-6 : f32
    %85 = arith.addf %84, %cst_26 : f32
    %86 = math.rsqrt %85 : f32
    %87 = vector.broadcast %75 : f32 to vector<80x1xf32>
    %88 = arith.mulf %69, %87 : vector<80x1xf32>
    %89 = arith.addf %59, %88 : vector<80x1xf32>
    %90 = vector.broadcast %86 : f32 to vector<80x1xf32>
    %91 = arith.mulf %69, %90 : vector<80x1xf32>
    %92 = arith.addf %62, %91 : vector<80x1xf32>
    %c24_i32_27 = arith.constant 24 : i32
    %93 = vector.broadcast %c24_i32_27 : i32 to vector<80x1xi32>
    %94 = arith.cmpi sge, %30, %93 : vector<80x1xi32>
    %c48_i32 = arith.constant 48 : i32
    %95 = vector.broadcast %c48_i32 : i32 to vector<80x1xi32>
    %96 = arith.cmpi slt, %30, %95 : vector<80x1xi32>
    %97 = arith.andi %94, %96 : vector<80x1xi1>
    %98 = arith.extui %97 : vector<80x1xi1> to vector<80x1xi32>
    %99 = arith.sitofp %98 : vector<80x1xi32> to vector<80x1xf32>
    %100 = arith.mulf %26, %99 : vector<80x1xf32>
    %101 = vector.shape_cast %100 : vector<80x1xf32> to vector<1x80x1xf32>
    %cst_28 = arith.constant dense<0.000000e+00> : vector<1xf32>
    %102 = vector.multi_reduction <add>, %101, %cst_28 [1, 2] : vector<1x80x1xf32> to vector<1xf32>
    %103 = vector.shape_cast %102 : vector<1xf32> to vector<1x1x1xf32>
    %104 = vector.extract %103[0, 0, 0] : f32 from vector<1x1x1xf32>
    %cst_29 = arith.constant 1.920000e+03 : f32
    %105 = arith.divf %104, %cst_29 : f32
    %106 = arith.mulf %29, %99 : vector<80x1xf32>
    %107 = vector.shape_cast %106 : vector<80x1xf32> to vector<1x80x1xf32>
    %cst_30 = arith.constant dense<0.000000e+00> : vector<1xf32>
    %108 = vector.multi_reduction <add>, %107, %cst_30 [1, 2] : vector<1x80x1xf32> to vector<1xf32>
    %109 = vector.shape_cast %108 : vector<1xf32> to vector<1x1x1xf32>
    %110 = vector.extract %109[0, 0, 0] : f32 from vector<1x1x1xf32>
    %cst_31 = arith.constant 1.920000e+03 : f32
    %111 = arith.divf %110, %cst_31 : f32
    %112 = arith.mulf %105, %105 : f32
    %113 = arith.subf %111, %112 : f32
    %cst_32 = arith.constant 0.000000e+00 : f32
    %114 = arith.maximumf %113, %cst_32 : f32
    %cst_33 = arith.constant 9.99999974E-6 : f32
    %115 = arith.addf %114, %cst_33 : f32
    %116 = math.rsqrt %115 : f32
    %117 = vector.broadcast %105 : f32 to vector<80x1xf32>
    %118 = arith.mulf %99, %117 : vector<80x1xf32>
    %119 = arith.addf %89, %118 : vector<80x1xf32>
    %120 = vector.broadcast %116 : f32 to vector<80x1xf32>
    %121 = arith.mulf %99, %120 : vector<80x1xf32>
    %122 = arith.addf %92, %121 : vector<80x1xf32>
    %c48_i32_34 = arith.constant 48 : i32
    %123 = vector.broadcast %c48_i32_34 : i32 to vector<80x1xi32>
    %124 = arith.cmpi sge, %30, %123 : vector<80x1xi32>
    %c80_i32 = arith.constant 80 : i32
    %125 = vector.broadcast %c80_i32 : i32 to vector<80x1xi32>
    %126 = arith.cmpi slt, %30, %125 : vector<80x1xi32>
    %127 = arith.andi %124, %126 : vector<80x1xi1>
    %128 = arith.extui %127 : vector<80x1xi1> to vector<80x1xi32>
    %129 = arith.sitofp %128 : vector<80x1xi32> to vector<80x1xf32>
    %130 = arith.mulf %26, %129 : vector<80x1xf32>
    %131 = vector.shape_cast %130 : vector<80x1xf32> to vector<1x80x1xf32>
    %cst_35 = arith.constant dense<0.000000e+00> : vector<1xf32>
    %132 = vector.multi_reduction <add>, %131, %cst_35 [1, 2] : vector<1x80x1xf32> to vector<1xf32>
    %133 = vector.shape_cast %132 : vector<1xf32> to vector<1x1x1xf32>
    %134 = vector.extract %133[0, 0, 0] : f32 from vector<1x1x1xf32>
    %cst_36 = arith.constant 2.560000e+03 : f32
    %135 = arith.divf %134, %cst_36 : f32
    %136 = arith.mulf %29, %129 : vector<80x1xf32>
    %137 = vector.shape_cast %136 : vector<80x1xf32> to vector<1x80x1xf32>
    %cst_37 = arith.constant dense<0.000000e+00> : vector<1xf32>
    %138 = vector.multi_reduction <add>, %137, %cst_37 [1, 2] : vector<1x80x1xf32> to vector<1xf32>
    %139 = vector.shape_cast %138 : vector<1xf32> to vector<1x1x1xf32>
    %140 = vector.extract %139[0, 0, 0] : f32 from vector<1x1x1xf32>
    %cst_38 = arith.constant 2.560000e+03 : f32
    %141 = arith.divf %140, %cst_38 : f32
    %142 = arith.mulf %135, %135 : f32
    %143 = arith.subf %141, %142 : f32
    %cst_39 = arith.constant 0.000000e+00 : f32
    %144 = arith.maximumf %143, %cst_39 : f32
    %cst_40 = arith.constant 9.99999974E-6 : f32
    %145 = arith.addf %144, %cst_40 : f32
    %146 = math.rsqrt %145 : f32
    %147 = vector.broadcast %135 : f32 to vector<80x1xf32>
    %148 = arith.mulf %129, %147 : vector<80x1xf32>
    %149 = arith.addf %119, %148 : vector<80x1xf32>
    %150 = vector.broadcast %146 : f32 to vector<80x1xf32>
    %151 = arith.mulf %129, %150 : vector<80x1xf32>
    %152 = arith.addf %122, %151 : vector<80x1xf32>
    %153 = vector.broadcast %149 : vector<80x1xf32> to vector<80x80xf32>
    %154 = arith.subf %24, %153 : vector<80x80xf32>
    %155 = vector.broadcast %152 : vector<80x1xf32> to vector<80x80xf32>
    %156 = arith.mulf %154, %155 : vector<80x80xf32>
    %c0_41 = arith.constant 0 : index
    %c0_42 = arith.constant 0 : index
    %157 = vector.load %arg4[%c0_41, %c0_42] : memref<80x80xbf16, #tpu.memory_space<vmem>>, vector<80x80xbf16>
    %cst_43 = arith.constant dense<0xFF800000> : vector<80xf32>
    %158 = vector.multi_reduction <maximumf>, %156, %cst_43 [1] : vector<80x80xf32> to vector<80xf32>
    %159 = vector.shape_cast %158 : vector<80xf32> to vector<80x1xf32>
    %160 = vector.broadcast %159 : vector<80x1xf32> to vector<80x80xf32>
    %161 = arith.subf %156, %160 : vector<80x80xf32>
    %162 = math.exp %161 : vector<80x80xf32>
    %cst_44 = arith.constant dense<0.000000e+00> : vector<80xf32>
    %163 = vector.multi_reduction <add>, %162, %cst_44 [1] : vector<80x80xf32> to vector<80xf32>
    %164 = vector.shape_cast %163 : vector<80xf32> to vector<80x1xf32>
    %165 = tpu.reciprocal %164 {approx = true} : vector<80x1xf32> -> vector<80x1xf32>
    %166 = vector.broadcast %165 : vector<80x1xf32> to vector<80x80xf32>
    %167 = arith.mulf %162, %166 : vector<80x80xf32>
    %168 = arith.truncf %167 : vector<80x80xf32> to vector<80x80xbf16>
    %cst_45 = arith.constant dense<0.000000e+00> : vector<80x80xf32>
    %169 = tpu.matmul %157, %168, %cst_45 {dimension_numbers = #tpu.dot_dimension_numbers<[1], [0], [0], [1], [0, 0, 1, 1], [], []>} : vector<80x80xbf16>, vector<80x80xbf16>, vector<80x80xf32> -> vector<80x80xf32>
    %170 = arith.truncf %169 : vector<80x80xf32> to vector<80x80xbf16>
    %c0_46 = arith.constant 0 : index
    %c0_47 = arith.constant 0 : index
    %c0_48 = arith.constant 0 : index
    %171 = vector.load %arg3[%c0_46, %c0_47, %c0_48] : memref<1x80x256xbf16, #tpu.memory_space<vmem>>, vector<1x80x256xbf16>
    %172 = vector.shape_cast %171 : vector<1x80x256xbf16> to vector<80x256xbf16>
    %cst_49 = arith.constant dense<0.000000e+00> : vector<80x256xf32>
    %173 = tpu.matmul %170, %172, %cst_49 {dimension_numbers = #tpu.dot_dimension_numbers<[1], [0], [0], [1], [0, 0, 1, 1], [], []>} : vector<80x80xbf16>, vector<80x256xbf16>, vector<80x256xf32> -> vector<80x256xf32>
    %c0_50 = arith.constant 0 : index
    %c0_51 = arith.constant 0 : index
    %c0_52 = arith.constant 0 : index
    %174 = vector.load %arg5[%c0_50, %c0_51, %c0_52] : memref<1x80x256xf32, #tpu.memory_space<vmem>>, vector<1x80x256xf32>
    %175 = vector.shape_cast %174 : vector<1x80x256xf32> to vector<80x256xf32>
    %176 = vector.shape_cast %173 : vector<80x256xf32> to vector<1x80x256xf32>
    tpu.vector_store %arg5[%c0_50, %c0_51, %c0_52], %176 {strides = array<i32>} : memref<1x80x256xf32, #tpu.memory_space<vmem>>, vector<1x80x256xf32>,
    return
  }
  func.func @transform_0(%arg0: i32) -> (i32, i32, i32) {
    %c0_i32 = arith.constant 0 : i32
    %c0_i32_0 = arith.constant 0 : i32
    %c0_i32_1 = arith.constant 0 : i32
    return %arg0, %c0_i32, %c0_i32_0 : i32, i32, i32
  }
  func.func @transform_1(%arg0: i32) -> (i32, i32, i32) {
    %c0_i32 = arith.constant 0 : i32
    %c0_i32_0 = arith.constant 0 : i32
    %c0_i32_1 = arith.constant 0 : i32
    return %arg0, %c0_i32, %c0_i32_0 : i32, i32, i32
  }
  func.func @transform_2(%arg0: i32) -> (i32, i32, i32) {
    %c0_i32 = arith.constant 0 : i32
    %c0_i32_0 = arith.constant 0 : i32
    %c0_i32_1 = arith.constant 0 : i32
    return %arg0, %c0_i32, %c0_i32_0 : i32, i32, i32
  }
  func.func @transform_3(%arg0: i32) -> (i32, i32) {
    %c0_i32 = arith.constant 0 : i32
    %c0_i32_0 = arith.constant 0 : i32
    %c0_i32_1 = arith.constant 0 : i32
    return %c0_i32, %c0_i32_0 : i32, i32
  }
  func.func @transform_4(%arg0: i32) -> (i32, i32, i32) {
    %c0_i32 = arith.constant 0 : i32
    %c0_i32_0 = arith.constant 0 : i32
    %c0_i32_1 = arith.constant 0 : i32
    return %arg0, %c0_i32, %c0_i32_0 : i32, i32, i32
  }
}

</mosaic_0001>

<llo_original>
// kernel: tpu_custom_call.1
$region0: #{tpu_custom_call.1}
  #allocation0 [shape = 'u32[]', space=smem, size = 0x4, offset = 0x4, fixed_abs, tag = 'smem constant byte address 0x4 - core index']
  #allocation1 [shape = 'u32[72,128]{1,0:T(1,128)}', space=vmem, size = 0x9000, scoped, tag = 'internal scratch']
  %s0 = inlined_call_operand.hbm [shape: f32[2,80,256], index: 0, kind: input, shape index: {}]
  %s1 = inlined_call_operand.hbm [shape: f32[2,80,256], index: 1, kind: input, shape index: {}]
  %s2 = inlined_call_operand.hbm [shape: bf16[2,80,256], index: 2, kind: input, shape index: {}]
  %s3 = inlined_call_operand.hbm [shape: bf16[80,80], index: 3, kind: input, shape index: {}]
  %s4 = inlined_call_operand.hbm [shape: f32[2,80,256], index: 4, kind: output, shape index: {}]
  %s5 = sld [smem:[#allocation0]]
  $region65: #{tpu_custom_call.1} parent=0
    _
  %s7 = ssub.s32 1, %s5
  %s8 = scalar_select 0, %s7, %s5
  $region1: #{tpu_custom_call.1} parent=0
    #allocation2 [shape = 'u8[163840]{0}', space=vmem, size = 0x28000, scoped, tag = 'input window, operand 0']
    #allocation3 [shape = 's32[2]{0}', space=sflag, size = 0x8, scoped, tag = 'scoped memory for tpu_custom_call.1']
    #allocation4 [shape = 's32[2]{0}', space=sflag, size = 0x8, scoped, tag = 'scoped memory for tpu_custom_call.1']
    #allocation5 [shape = 'u8[163840]{0}', space=vmem, size = 0x28000, scoped, tag = 'input window, operand 1']
    #allocation6 [shape = 's32[2]{0}', space=sflag, size = 0x8, scoped, tag = 'scoped memory for tpu_custom_call.1']
    #allocation7 [shape = 'u8[81920]{0}', space=vmem, size = 0x14000, scoped, tag = 'input window, operand 2']
    #allocation8 [shape = 'u8[20480]{0}', space=vmem, size = 0x5000, scoped, tag = 'input window, operand 3, single buffered']
    #allocation9 [shape = 's32[1]{0}', space=sflag, size = 0x4, scoped, tag = 'scoped memory for tpu_custom_call.1']
    #allocation10 [shape = 'u8[163840]{0}', space=vmem, size = 0x28000, scoped, tag = 'output window, operand 0']
    %9 = vsyncpa [#allocation3], 0
    %s10 = scalar_lea.sflag [#allocation3], 1
    %11 = vsyncpa %s10, 0
    %12 = vsyncpa [#allocation6], 0
    %s13 = scalar_lea.sflag [#allocation6], 1
    %14 = vsyncpa %s13, 0
    %15 = vsyncpa [#allocation9], 0
    %16 = vsyncpa [#allocation4], 0
    %s17 = scalar_lea.sflag [#allocation4], 1
    %18 = vsyncpa %s17, 0
    loop: start=0, step=1, limit=4
    $region2: #{tpu_custom_call.1} parent=1 // loop_pre_header
      _
    $region3: #{tpu_custom_call.1} parent=1 // loop_header
      %s20 = sphi 0, %s24
      %p21 = scmp.ge.s32.totalorder %s20, 4
      %s30 = sphi 0, %s32
      %s33 = sphi 0, %s30
      %s34 = sphi 0, %s33
      %s50 = sphi 0, %s34
      %s56 = sphi 0, %s58
      %s59 = sphi 0, %s56
      %s60 = sphi 0, %s59
      %s76 = sphi 0, %s60
      %s82 = sphi 0, %s84
      %s85 = sphi 0, %s82
      %s86 = sphi 0, %s85
      %s102 = sphi 0, %s86
      %s106 = sphi 0, %s106
      %s108 = sphi 0, %s106
      %s109 = sphi 0, %s108
      %s123 = sphi 0, %s109
      %s129 = sphi 0, %s131
      %s132 = sphi 0, %s129
      %s133 = sphi 0, %s132
      %s149 = sphi 0, %s133
    $region4: #{tpu_custom_call.1} parent=1 // loop_header_branch
      %23 = sbr.rel (%p21) target = $region8
    $region5: #{tpu_custom_call.1} parent=1 // loop_body
      %s25 = ssub.s32 %s20, 1
      %s26 = ssub.s32 %s20, 2
      %s27 = sadd.s32 %s20, 1
      %s28 = ssub.s32 %s20, %s27
      %p29 = scmp.eq.s32.totalorder %s28, 0
      %s31 = sadd.s32 %s30, 1
      %s32 = scalar_select %p29, %s30, %s31
      %p35 = pneg %p29
      %p36 = scmp.eq.s32.totalorder %s20, 1
      %p37 = por %p35, %p36
      %p38 = scmp.ne.s32.totalorder %s30, %s33
      %p39 = scmp.eq.s32.totalorder %s20, 0
      %p40 = por %p38, %p39
      %p41 = scmp.ne.s32.totalorder %s30, %s33
      %p42 = scmp.eq.s32.totalorder %s25, 1
      %p43 = por %p41, %p42
      %p44 = scmp.ne.s32.totalorder %s33, %s34
      %p45 = scmp.eq.s32.totalorder %s25, 0
      %p46 = por %p44, %p45
      %p47 = scmp.ne.s32.totalorder %s33, %s34
      %p48 = scmp.eq.s32.totalorder %s26, 1
      %p49 = por %p47, %p48
      %p51 = scmp.ne.s32.totalorder %s34, %s50
      %p52 = scmp.eq.s32.totalorder %s26, 0
      %p53 = por %p51, %p52
      %s54 = ssub.s32 %s20, %s27
      %p55 = scmp.eq.s32.totalorder %s54, 0
      %s57 = sadd.s32 %s56, 1
      %s58 = scalar_select %p55, %s56, %s57
      %p61 = pneg %p55
      %p62 = scmp.eq.s32.totalorder %s20, 1
      %p63 = por %p61, %p62
      %p64 = scmp.ne.s32.totalorder %s56, %s59
      %p65 = scmp.eq.s32.totalorder %s20, 0
      %p66 = por %p64, %p65
      %p67 = scmp.ne.s32.totalorder %s56, %s59
      %p68 = scmp.eq.s32.totalorder %s25, 1
      %p69 = por %p67, %p68
      %p70 = scmp.ne.s32.totalorder %s59, %s60
      %p71 = scmp.eq.s32.totalorder %s25, 0
      %p72 = por %p70, %p71
      %p73 = scmp.ne.s32.totalorder %s59, %s60
      %p74 = scmp.eq.s32.totalorder %s26, 1
      %p75 = por %p73, %p74
      %p77 = scmp.ne.s32.totalorder %s60, %s76
      %p78 = scmp.eq.s32.totalorder %s26, 0
      %p79 = por %p77, %p78
      %s80 = ssub.s32 %s20, %s27
      %p81 = scmp.eq.s32.totalorder %s80, 0
      %s83 = sadd.s32 %s82, 1
      %s84 = scalar_select %p81, %s82, %s83
      %p87 = pneg %p81
      %p88 = scmp.eq.s32.totalorder %s20, 1
      %p89 = por %p87, %p88
      %p90 = scmp.ne.s32.totalorder %s82, %s85
      %p91 = scmp.eq.s32.totalorder %s20, 0
      %p92 = por %p90, %p91
      %p93 = scmp.ne.s32.totalorder %s82, %s85
      %p94 = scmp.eq.s32.totalorder %s25, 1
      %p95 = por %p93, %p94
      %p96 = scmp.ne.s32.totalorder %s85, %s86
      %p97 = scmp.eq.s32.totalorder %s25, 0
      %p98 = por %p96, %p97
      %p99 = scmp.ne.s32.totalorder %s85, %s86
      %p100 = scmp.eq.s32.totalorder %s26, 1
      %p101 = por %p99, %p100
      %p103 = scmp.ne.s32.totalorder %s86, %s102
      %p104 = scmp.eq.s32.totalorder %s26, 0
      %p105 = por %p103, %p104
      %s107 = sadd.s32 %s106, 1
      %p110 = scmp.eq.s32.totalorder %s20, 1
      %p111 = scmp.ne.s32.totalorder %s106, %s108
      %p112 = scmp.eq.s32.totalorder %s20, 0
      %p113 = por %p111, %p112
      %p114 = scmp.ne.s32.totalorder %s106, %s108
      %p115 = scmp.eq.s32.totalorder %s25, 1
      %p116 = por %p114, %p115
      %p117 = scmp.ne.s32.totalorder %s108, %s109
      %p118 = scmp.eq.s32.totalorder %s25, 0
      %p119 = por %p117, %p118
      %p120 = scmp.ne.s32.totalorder %s108, %s109
      %p121 = scmp.eq.s32.totalorder %s26, 1
      %p122 = por %p120, %p121
      %p124 = scmp.ne.s32.totalorder %s109, %s123
      %p125 = scmp.eq.s32.totalorder %s26, 0
      %p126 = por %p124, %p125
      %s127 = ssub.s32 %s20, %s27
      %p128 = scmp.eq.s32.totalorder %s127, 0
      %s130 = sadd.s32 %s129, 1
      %s131 = scalar_select %p128, %s129, %s130
      %p134 = pneg %p128
      %p135 = scmp.eq.s32.totalorder %s20, 1
      %p136 = por %p134, %p135
      %p137 = scmp.ne.s32.totalorder %s129, %s132
      %p138 = scmp.eq.s32.totalorder %s20, 0
      %p139 = por %p137, %p138
      %p140 = scmp.ne.s32.totalorder %s129, %s132
      %p141 = scmp.eq.s32.totalorder %s25, 1
      %p142 = por %p140, %p141
      %p143 = scmp.ne.s32.totalorder %s132, %s133
      %p144 = scmp.eq.s32.totalorder %s25, 0
      %p145 = por %p143, %p144
      %p146 = scmp.ne.s32.totalorder %s132, %s133
      %p147 = scmp.eq.s32.totalorder %s26, 1
      %p148 = por %p146, %p147
      %p150 = scmp.ne.s32.totalorder %s133, %s149
      %p151 = scmp.eq.s32.totalorder %s26, 0
      %p152 = por %p150, %p151
      %p153 = scmp.le.s32.totalorder 1, %s20
      %p154 = scmp.lt.s32.totalorder %s20, 3
      %p155 = pnand %p153, %p154
      %p156 = pneg %p155
      // Predicated region
      $region9: #{tpu_custom_call.1} parent=5 // pred_check
        _
      $region10: #{tpu_custom_call.1} parent=5 // pred_check_branch
        %158 = sbr.rel (%p155) target = $region12
      $region11: #{tpu_custom_call.1} parent=5 // pred_region
        %s159 = ssub.s32 %s20, 1
        // Predicated region
        $region13: #{tpu_custom_call.1} parent=11 // pred_check
          %p160 = pneg %p119
        $region14: #{tpu_custom_call.1} parent=11 // pred_check_branch
          %162 = sbr.rel (%p160) target = $region16
        $region15: #{tpu_custom_call.1} parent=11 // pred_region
          %164 = vsyncadd [#allocation9], 0
          %s165 = sshll.u32 %s3, 4
          %s166 = int_to_ptr.hbm [resolvable:$true] %s165
          %s167 = sshll.u32 [#allocation8], 4
          %s168 = int_to_ptr.vmem [resolvable:$true] %s167
          %173 = dma.hbm_to_vmem [thread:$0]  %s166, 640, %s168, [#allocation9], 64, 64, 4
        $region16: #{tpu_custom_call.1} parent=11 // pred_fallthru
          _
      $region12: #{tpu_custom_call.1} parent=5 // pred_fallthru
        _
      %p174 = scmp.lt.s32.totalorder %s20, 2
      // Predicated region
      $region17: #{tpu_custom_call.1} parent=5 // pred_check
        %p175 = pneg %p174
      $region18: #{tpu_custom_call.1} parent=5 // pred_check_branch
        %177 = sbr.rel (%p175) target = $region20
      $region19: #{tpu_custom_call.1} parent=5 // pred_region
        // Predicated region
        $region21: #{tpu_custom_call.1} parent=19 // pred_check
          %p178 = pneg %p40
        $region22: #{tpu_custom_call.1} parent=19 // pred_check_branch
          %180 = sbr.rel (%p178) target = $region24
        $region23: #{tpu_custom_call.1} parent=19 // pred_region
          %s181 = sand.u32 %s30, 1
          %s182 = scalar_lea.sflag [#allocation3], %s181
          %s183 = sand.u32 %s30, 1
          %s184 = smul.addr %s183, 160
          %s185 = scalar_lea.vmem [#allocation2], %s184
          %187 = vsyncadd %s182, 0
          %s188 = smul.addr %s20, 20
          %s189 = smul.addr %s188, 8
          %s190 = scalar_lea.hbm %s0, %s189
          %s191 = sshll.u32 %s190, 4
          %s192 = int_to_ptr.hbm [resolvable:$true] %s191
          %s193 = sshll.u32 %s185, 4
          %s194 = int_to_ptr.vmem [resolvable:$true] %s193
          %199 = dma.hbm_to_vmem [thread:$0]  %s192, 2560, %s194, %s182, 256, 256, 16
        $region24: #{tpu_custom_call.1} parent=19 // pred_fallthru
          _
        // Predicated region
        $region25: #{tpu_custom_call.1} parent=19 // pred_check
          %p200 = pneg %p66
        $region26: #{tpu_custom_call.1} parent=19 // pred_check_branch
          %202 = sbr.rel (%p200) target = $region28
        $region27: #{tpu_custom_call.1} parent=19 // pred_region
          %s203 = sand.u32 %s20, 1
          %s204 = scalar_lea.sflag [#allocation6], %s203
          %s205 = sand.u32 %s56, 1
          %s206 = smul.addr %s205, 160
          %s207 = scalar_lea.vmem [#allocation5], %s206
          %209 = vsyncadd %s204, 0
          %s210 = smul.addr %s20, 20
          %s211 = smul.addr %s210, 8
          %s212 = scalar_lea.hbm %s1, %s211
          %s213 = sshll.u32 %s212, 4
          %s214 = int_to_ptr.hbm [resolvable:$true] %s213
          %s215 = sshll.u32 %s207, 4
          %s216 = int_to_ptr.vmem [resolvable:$true] %s215
          %221 = dma.hbm_to_vmem [thread:$0]  %s214, 2560, %s216, %s204, 256, 256, 16
        $region28: #{tpu_custom_call.1} parent=19 // pred_fallthru
          _
        // Predicated region
        $region29: #{tpu_custom_call.1} parent=19 // pred_check
          %p222 = pneg %p92
        $region30: #{tpu_custom_call.1} parent=19 // pred_check_branch
          %224 = sbr.rel (%p222) target = $region32
        $region31: #{tpu_custom_call.1} parent=19 // pred_region
          %s225 = sand.u32 %s20, 1
          %s226 = scalar_lea.sflag [#allocation6], %s225
          %s227 = sand.u32 %s82, 1
          %s228 = smul.addr %s227, 80
          %s229 = scalar_lea.vmem [#allocation7], %s228
          %231 = vsyncadd %s226, 0
          %s232 = smul.addr %s20, 20
          %s233 = smul.addr %s232, 4
          %s234 = scalar_lea.hbm %s2, %s233
          %s235 = sshll.u32 %s234, 4
          %s236 = int_to_ptr.hbm [resolvable:$true] %s235
          %s237 = sshll.u32 %s229, 4
          %s238 = int_to_ptr.vmem [resolvable:$true] %s237
          %243 = dma.hbm_to_vmem [thread:$0]  %s236, 1280, %s238, %s226, 128, 128, 8
        $region32: #{tpu_custom_call.1} parent=19 // pred_fallthru
          _
      $region20: #{tpu_custom_call.1} parent=5 // pred_fallthru
        _
      %p244 = scmp.le.s32.totalorder 1, %s20
      %p245 = scmp.lt.s32.totalorder %s20, 3
      %p246 = pnand %p244, %p245
      %p247 = pneg %p246
      // Predicated region
      $region33: #{tpu_custom_call.1} parent=5 // pred_check
        _
      $region34: #{tpu_custom_call.1} parent=5 // pred_check_branch
        %249 = sbr.rel (%p246) target = $region36
      $region35: #{tpu_custom_call.1} parent=5 // pred_region
        %s250 = ssub.s32 %s20, 1
        %s251 = sand.u32 %s33, 1
        %s252 = scalar_lea.sflag [#allocation3], %s251
        %s253 = sand.u32 %s33, 1
        %s254 = smul.addr %s253, 160
        %s255 = scalar_lea.vmem [#allocation2], %s254
        // Predicated region
        $region37: #{tpu_custom_call.1} parent=35 // pred_check
          %p256 = pneg %p46
        $region38: #{tpu_custom_call.1} parent=35 // pred_check_branch
          %258 = sbr.rel (%p256) target = $region40
        $region39: #{tpu_custom_call.1} parent=35 // pred_region
          %260 = dma.done %s252, 2560
        $region40: #{tpu_custom_call.1} parent=35 // pred_fallthru
          _
        %s261 = sand.u32 %s25, 1
        %s262 = scalar_lea.sflag [#allocation6], %s261
        %s263 = sand.u32 %s59, 1
        %s264 = smul.addr %s263, 160
        %s265 = scalar_lea.vmem [#allocation5], %s264
        // Predicated region
        $region41: #{tpu_custom_call.1} parent=35 // pred_check
          %p266 = pneg %p72
        $region42: #{tpu_custom_call.1} parent=35 // pred_check_branch
          %268 = sbr.rel (%p266) target = $region44
        $region43: #{tpu_custom_call.1} parent=35 // pred_region
          %270 = dma.done %s262, 2560
        $region44: #{tpu_custom_call.1} parent=35 // pred_fallthru
          _
        %s271 = sand.u32 %s25, 1
        %s272 = scalar_lea.sflag [#allocation6], %s271
        %s273 = sand.u32 %s85, 1
        %s274 = smul.addr %s273, 80
        %s275 = scalar_lea.vmem [#allocation7], %s274
        // Predicated region
        $region45: #{tpu_custom_call.1} parent=35 // pred_check
          %p276 = pneg %p98
        $region46: #{tpu_custom_call.1} parent=35 // pred_check_branch
          %278 = sbr.rel (%p276) target = $region48
        $region47: #{tpu_custom_call.1} parent=35 // pred_region
          %280 = dma.done %s272, 1280
        $region48: #{tpu_custom_call.1} parent=35 // pred_fallthru
          _
        // Predicated region
        $region49: #{tpu_custom_call.1} parent=35 // pred_check
          %p281 = pneg %p119
        $region50: #{tpu_custom_call.1} parent=35 // pred_check_branch
          %283 = sbr.rel (%p281) target = $region52
        $region51: #{tpu_custom_call.1} parent=35 // pred_region
          %285 = dma.done [#allocation9], 640
        $region52: #{tpu_custom_call.1} parent=35 // pred_fallthru
          _
        %s286 = sand.u32 %s33, 1
        %s287 = scalar_lea.sflag [#allocation3], %s286
        %s288 = sand.u32 %s33, 1
        %s289 = smul.addr %s288, 160
        %s290 = scalar_lea.vmem [#allocation2], %s289
        %p291 = pneg %p46
        %p292 = pneg %p43
        %s293 = sand.u32 %s25, 1
        %s294 = scalar_lea.sflag [#allocation6], %s293
        %s295 = sand.u32 %s59, 1
        %s296 = smul.addr %s295, 160
        %s297 = scalar_lea.vmem [#allocation5], %s296
        %p298 = pneg %p72
        %p299 = pneg %p69
        %s300 = sand.u32 %s25, 1
        %s301 = scalar_lea.sflag [#allocation6], %s300
        %s302 = sand.u32 %s85, 1
        %s303 = smul.addr %s302, 80
        %s304 = scalar_lea.vmem [#allocation7], %s303
        %p305 = pneg %p98
        %p306 = pneg %p95
        %p307 = pneg %p119
        %p308 = pneg %p116
        %p309 = pneg %p145
        %p310 = pneg %p142
        %s311 = sand.u32 %s132, 1
        %s312 = scalar_lea.sflag [#allocation4], %s311
        %s313 = sand.u32 %s132, 1
        %s314 = smul.addr %s313, 160
        %s315 = scalar_lea.vmem [#allocation10], %s314
        %v317 = vld [vmem:[%s255] sm:$0xff]
        %v318 = vld [vmem:[%s255 + $0x8] sm:$0xff]
        %v319 = vld [vmem:[%s255 + $0x10] sm:$0xff]
        %v320 = vld [vmem:[%s255 + $0x18] sm:$0xff]
        %v321 = vld [vmem:[%s255 + $0x20] sm:$0xff]
        %v322 = vld [vmem:[%s255 + $0x28] sm:$0xff]
        %v323 = vld [vmem:[%s255 + $0x30] sm:$0xff]
        %v324 = vld [vmem:[%s255 + $0x38] sm:$0xff]
        %v325 = vld [vmem:[%s255 + $0x40] sm:$0xff]
        %v326 = vld [vmem:[%s255 + $0x48] sm:$0xff]
        %v327 = vld [vmem:[%s255 + $0x50] sm:$0xff]
        %v328 = vld [vmem:[%s255 + $0x58] sm:$0xff]
        %v329 = vld [vmem:[%s255 + $0x60] sm:$0xff]
        %v330 = vld [vmem:[%s255 + $0x68] sm:$0xff]
        %v331 = vld [vmem:[%s255 + $0x70] sm:$0xff]
        %v332 = vld [vmem:[%s255 + $0x78] sm:$0xff]
        %v333 = vld [vmem:[%s255 + $0x80] sm:$0xff]
        %v334 = vld [vmem:[%s255 + $0x88] sm:$0xff]
        %v335 = vld [vmem:[%s255 + $0x90] sm:$0xff]
        %v336 = vld [vmem:[%s255 + $0x98] sm:$0xff]
        %v337 = vld [vmem:[%s265] sm:$0xff]
        %v338 = vld [vmem:[%s265 + $0x8] sm:$0xff]
        %v339 = vld [vmem:[%s265 + $0x10] sm:$0xff]
        %v340 = vld [vmem:[%s265 + $0x18] sm:$0xff]
        %v341 = vld [vmem:[%s265 + $0x20] sm:$0xff]
        %v342 = vld [vmem:[%s265 + $0x28] sm:$0xff]
        %v343 = vld [vmem:[%s265 + $0x30] sm:$0xff]
        %v344 = vld [vmem:[%s265 + $0x38] sm:$0xff]
        %v345 = vld [vmem:[%s265 + $0x40] sm:$0xff]
        %v346 = vld [vmem:[%s265 + $0x48] sm:$0xff]
        %v347 = vld [vmem:[%s265 + $0x50] sm:$0xff]
        %v348 = vld [vmem:[%s265 + $0x58] sm:$0xff]
        %v349 = vld [vmem:[%s265 + $0x60] sm:$0xff]
        %v350 = vld [vmem:[%s265 + $0x68] sm:$0xff]
        %v351 = vld [vmem:[%s265 + $0x70] sm:$0xff]
        %v352 = vld [vmem:[%s265 + $0x78] sm:$0xff]
        %v353 = vld [vmem:[%s265 + $0x80] sm:$0xff]
        %v354 = vld [vmem:[%s265 + $0x88] sm:$0xff]
        %v355 = vld [vmem:[%s265 + $0x90] sm:$0xff]
        %v356 = vld [vmem:[%s265 + $0x98] sm:$0xff]
        %v357 = vmul.f32 %v317, %v317
        %v358 = vmul.f32 %v318, %v318
        %v359 = vmul.f32 %v319, %v319
        %v360 = vmul.f32 %v320, %v320
        %v361 = vmul.f32 %v321, %v321
        %v362 = vmul.f32 %v322, %v322
        %v363 = vmul.f32 %v323, %v323
        %v364 = vmul.f32 %v324, %v324
        %v365 = vmul.f32 %v325, %v325
        %v366 = vmul.f32 %v326, %v326
        %v367 = vmul.f32 %v327, %v327
        %v368 = vmul.f32 %v328, %v328
        %v369 = vmul.f32 %v329, %v329
        %v370 = vmul.f32 %v330, %v330
        %v371 = vmul.f32 %v331, %v331
        %v372 = vmul.f32 %v332, %v332
        %v373 = vmul.f32 %v333, %v333
        %v374 = vmul.f32 %v334, %v334
        %v375 = vmul.f32 %v335, %v335
        %v376 = vmul.f32 %v336, %v336
        %v377 = vadd.f32 %v357, %v358
        %378 = vadd.xlane.f32.xlu0 %v377
        %v379 = vpop.xlane.xlu0 %378
        %v380 = vadd.f32 %v359, %v360
        %381 = vadd.xlane.f32.xlu0 %v380
        %v382 = vpop.xlane.xlu0 %381
        %v383 = vadd.f32 %v361, %v362
        %384 = vadd.xlane.f32.xlu0 %v383
        %v385 = vpop.xlane.xlu0 %384
        %v386 = vadd.f32 %v363, %v364
        %387 = vadd.xlane.f32.xlu0 %v386
        %v388 = vpop.xlane.xlu0 %387
        %v389 = vadd.f32 %v365, %v366
        %390 = vadd.xlane.f32.xlu0 %v389
        %v391 = vpop.xlane.xlu0 %390
        %v392 = vadd.f32 %v367, %v368
        %393 = vadd.xlane.f32.xlu0 %v392
        %v394 = vpop.xlane.xlu0 %393
        %v395 = vadd.f32 %v369, %v370
        %396 = vadd.xlane.f32.xlu0 %v395
        %v397 = vpop.xlane.xlu0 %396
        %v398 = vadd.f32 %v371, %v372
        %399 = vadd.xlane.f32.xlu0 %v398
        %v400 = vpop.xlane.xlu0 %399
        %v401 = vadd.f32 %v373, %v374
        %402 = vadd.xlane.f32.xlu0 %v401
        %v403 = vpop.xlane.xlu0 %402
        %v404 = vadd.f32 %v375, %v376
        %405 = vadd.xlane.f32.xlu0 %v404
        %v406 = vpop.xlane.xlu0 %405
        %v407 = vmul.f32 %v337, %v337
        %v408 = vmul.f32 %v338, %v338
        %v409 = vmul.f32 %v339, %v339
        %v410 = vmul.f32 %v340, %v340
        %v411 = vmul.f32 %v341, %v341
        %v412 = vmul.f32 %v342, %v342
        %v413 = vmul.f32 %v343, %v343
        %v414 = vmul.f32 %v344, %v344
        %v415 = vmul.f32 %v345, %v345
        %v416 = vmul.f32 %v346, %v346
        %v417 = vmul.f32 %v347, %v347
        %v418 = vmul.f32 %v348, %v348
        %v419 = vmul.f32 %v349, %v349
        %v420 = vmul.f32 %v350, %v350
        %v421 = vmul.f32 %v351, %v351
        %v422 = vmul.f32 %v352, %v352
        %v423 = vmul.f32 %v353, %v353
        %v424 = vmul.f32 %v354, %v354
        %v425 = vmul.f32 %v355, %v355
        %v426 = vmul.f32 %v356, %v356
        %v427 = vadd.f32 %v407, %v408
        %428 = vadd.xlane.f32.xlu0 %v427
        %v429 = vpop.xlane.xlu0 %428
        %v430 = vadd.f32 %v409, %v410
        %431 = vadd.xlane.f32.xlu0 %v430
        %v432 = vpop.xlane.xlu0 %431
        %v433 = vadd.f32 %v411, %v412
        %434 = vadd.xlane.f32.xlu0 %v433
        %v435 = vpop.xlane.xlu0 %434
        %v436 = vadd.f32 %v413, %v414
        %437 = vadd.xlane.f32.xlu0 %v436
        %v438 = vpop.xlane.xlu0 %437
        %v439 = vadd.f32 %v415, %v416
        %440 = vadd.xlane.f32.xlu0 %v439
        %v441 = vpop.xlane.xlu0 %440
        %v442 = vadd.f32 %v417, %v418
        %443 = vadd.xlane.f32.xlu0 %v442
        %v444 = vpop.xlane.xlu0 %443
        %v445 = vadd.f32 %v419, %v420
        %446 = vadd.xlane.f32.xlu0 %v445
        %v447 = vpop.xlane.xlu0 %446
        %v448 = vadd.f32 %v421, %v422
        %449 = vadd.xlane.f32.xlu0 %v448
        %v450 = vpop.xlane.xlu0 %449
        %v451 = vadd.f32 %v423, %v424
        %452 = vadd.xlane.f32.xlu0 %v451
        %v453 = vpop.xlane.xlu0 %452
        %v454 = vadd.f32 %v425, %v426
        %455 = vadd.xlane.f32.xlu0 %v454
        %v456 = vpop.xlane.xlu0 %455
        %v457 = vmax.f32 %v379, 1e-24
        %v458 = vmax.f32 %v382, 1e-24
        %v459 = vmax.f32 %v385, 1e-24
        %v460 = vmax.f32 %v388, 1e-24
        %v461 = vmax.f32 %v391, 1e-24
        %v462 = vmax.f32 %v394, 1e-24
        %v463 = vmax.f32 %v397, 1e-24
        %v464 = vmax.f32 %v400, 1e-24
        %v465 = vmax.f32 %v403, 1e-24
        %v466 = vmax.f32 %v406, 1e-24
        %v467 = vrsqrt.pop %v457
        %v468 = vmul.f32 %v467, %v457
        %v469 = vmul.f32 %v468, %v467
        %v470 = vmul.f32 0.5, %v469
        %v471 = vsub.f32 1.5, %v470
        %v472 = vmul.f32 %v467, %v471
        %vm473 = vweird.f32 %v457
        %vm474 = vweird.f32 %v467
        %vm475 = vmor %vm473, %vm474
        %v476 = vsel %vm475, %v467, %v472
        %v477 = vrsqrt.pop %v458
        %v478 = vmul.f32 %v477, %v458
        %v479 = vmul.f32 %v478, %v477
        %v480 = vmul.f32 0.5, %v479
        %v481 = vsub.f32 1.5, %v480
        %v482 = vmul.f32 %v477, %v481
        %vm483 = vweird.f32 %v458
        %vm484 = vweird.f32 %v477
        %vm485 = vmor %vm483, %vm484
        %v486 = vsel %vm485, %v477, %v482
        %v487 = vrsqrt.pop %v459
        %v488 = vmul.f32 %v487, %v459
        %v489 = vmul.f32 %v488, %v487
        %v490 = vmul.f32 0.5, %v489
        %v491 = vsub.f32 1.5, %v490
        %v492 = vmul.f32 %v487, %v491
        %vm493 = vweird.f32 %v459
        %vm494 = vweird.f32 %v487
        %vm495 = vmor %vm493, %vm494
        %v496 = vsel %vm495, %v487, %v492
        %v497 = vrsqrt.pop %v460
        %v498 = vmul.f32 %v497, %v460
        %v499 = vmul.f32 %v498, %v497
        %v500 = vmul.f32 0.5, %v499
        %v501 = vsub.f32 1.5, %v500
        %v502 = vmul.f32 %v497, %v501
        %vm503 = vweird.f32 %v460
        %vm504 = vweird.f32 %v497
        %vm505 = vmor %vm503, %vm504
        %v506 = vsel %vm505, %v497, %v502
        %v507 = vrsqrt.pop %v461
        %v508 = vmul.f32 %v507, %v461
        %v509 = vmul.f32 %v508, %v507
        %v510 = vmul.f32 0.5, %v509
        %v511 = vsub.f32 1.5, %v510
        %v512 = vmul.f32 %v507, %v511
        %vm513 = vweird.f32 %v461
        %vm514 = vweird.f32 %v507
        %vm515 = vmor %vm513, %vm514
        %v516 = vsel %vm515, %v507, %v512
        %v517 = vrsqrt.pop %v462
        %v518 = vmul.f32 %v517, %v462
        %v519 = vmul.f32 %v518, %v517
        %v520 = vmul.f32 0.5, %v519
        %v521 = vsub.f32 1.5, %v520
        %v522 = vmul.f32 %v517, %v521
        %vm523 = vweird.f32 %v462
        %vm524 = vweird.f32 %v517
        %vm525 = vmor %vm523, %vm524
        %v526 = vsel %vm525, %v517, %v522
        %v527 = vrsqrt.pop %v463
        %v528 = vmul.f32 %v527, %v463
        %v529 = vmul.f32 %v528, %v527
        %v530 = vmul.f32 0.5, %v529
        %v531 = vsub.f32 1.5, %v530
        %v532 = vmul.f32 %v527, %v531
        %vm533 = vweird.f32 %v463
        %vm534 = vweird.f32 %v527
        %vm535 = vmor %vm533, %vm534
        %v536 = vsel %vm535, %v527, %v532
        %v537 = vrsqrt.pop %v464
        %v538 = vmul.f32 %v537, %v464
        %v539 = vmul.f32 %v538, %v537
        %v540 = vmul.f32 0.5, %v539
        %v541 = vsub.f32 1.5, %v540
        %v542 = vmul.f32 %v537, %v541
        %vm543 = vweird.f32 %v464
        %vm544 = vweird.f32 %v537
        %vm545 = vmor %vm543, %vm544
        %v546 = vsel %vm545, %v537, %v542
        %v547 = vrsqrt.pop %v465
        %v548 = vmul.f32 %v547, %v465
        %v549 = vmul.f32 %v548, %v547
        %v550 = vmul.f32 0.5, %v549
        %v551 = vsub.f32 1.5, %v550
        %v552 = vmul.f32 %v547, %v551
        %vm553 = vweird.f32 %v465
        %vm554 = vweird.f32 %v547
        %vm555 = vmor %vm553, %vm554
        %v556 = vsel %vm555, %v547, %v552
        %v557 = vrsqrt.pop %v466
        %v558 = vmul.f32 %v557, %v466
        %v559 = vmul.f32 %v558, %v557
        %v560 = vmul.f32 0.5, %v559
        %v561 = vsub.f32 1.5, %v560
        %v562 = vmul.f32 %v557, %v561
        %vm563 = vweird.f32 %v466
        %vm564 = vweird.f32 %v557
        %vm565 = vmor %vm563, %vm564
        %v566 = vsel %vm565, %v557, %v562
        %v567 = vmul.f32 %v476, 0.1118034
        %v568 = vmul.f32 %v486, 0.1118034
        %v569 = vmul.f32 %v496, 0.1118034
        %v570 = vmul.f32 %v506, 0.1118034
        %v571 = vmul.f32 %v516, 0.1118034
        %v572 = vmul.f32 %v526, 0.1118034
        %v573 = vmul.f32 %v536, 0.1118034
        %v574 = vmul.f32 %v546, 0.1118034
        %v575 = vmul.f32 %v556, 0.1118034
        %v576 = vmul.f32 %v566, 0.1118034
        %v577 = vmul.f32 %v317, %v567
        %v578 = vmul.f32 %v318, %v567
        %v579 = vmul.f32 %v319, %v568
        %v580 = vmul.f32 %v320, %v568
        %v581 = vmul.f32 %v321, %v569
        %v582 = vmul.f32 %v322, %v569
        %v583 = vmul.f32 %v323, %v570
        %v584 = vmul.f32 %v324, %v570
        %v585 = vmul.f32 %v325, %v571
        %v586 = vmul.f32 %v326, %v571
        %v587 = vmul.f32 %v327, %v572
        %v588 = vmul.f32 %v328, %v572
        %v589 = vmul.f32 %v329, %v573
        %v590 = vmul.f32 %v330, %v573
        %v591 = vmul.f32 %v331, %v574
        %v592 = vmul.f32 %v332, %v574
        %v593 = vmul.f32 %v333, %v575
        %v594 = vmul.f32 %v334, %v575
        %v595 = vmul.f32 %v335, %v576
        %v596 = vmul.f32 %v336, %v576
        %v597 = vmax.f32 %v429, 1e-24
        %v598 = vmax.f32 %v432, 1e-24
        %v599 = vmax.f32 %v435, 1e-24
        %v600 = vmax.f32 %v438, 1e-24
        %v601 = vmax.f32 %v441, 1e-24
        %v602 = vmax.f32 %v444, 1e-24
        %v603 = vmax.f32 %v447, 1e-24
        %v604 = vmax.f32 %v450, 1e-24
        %v605 = vmax.f32 %v453, 1e-24
        %v606 = vmax.f32 %v456, 1e-24
        %v607 = vrsqrt.pop %v597
        %v608 = vmul.f32 %v607, %v597
        %v609 = vmul.f32 %v608, %v607
        %v610 = vmul.f32 0.5, %v609
        %v611 = vsub.f32 1.5, %v610
        %v612 = vmul.f32 %v607, %v611
        %vm613 = vweird.f32 %v597
        %vm614 = vweird.f32 %v607
        %vm615 = vmor %vm613, %vm614
        %v616 = vsel %vm615, %v607, %v612
        %v617 = vrsqrt.pop %v598
        %v618 = vmul.f32 %v617, %v598
        %v619 = vmul.f32 %v618, %v617
        %v620 = vmul.f32 0.5, %v619
        %v621 = vsub.f32 1.5, %v620
        %v622 = vmul.f32 %v617, %v621
        %vm623 = vweird.f32 %v598
        %vm624 = vweird.f32 %v617
        %vm625 = vmor %vm623, %vm624
        %v626 = vsel %vm625, %v617, %v622
        %v627 = vrsqrt.pop %v599
        %v628 = vmul.f32 %v627, %v599
        %v629 = vmul.f32 %v628, %v627
        %v630 = vmul.f32 0.5, %v629
        %v631 = vsub.f32 1.5, %v630
        %v632 = vmul.f32 %v627, %v631
        %vm633 = vweird.f32 %v599
        %vm634 = vweird.f32 %v627
        %vm635 = vmor %vm633, %vm634
        %v636 = vsel %vm635, %v627, %v632
        %v637 = vrsqrt.pop %v600
        %v638 = vmul.f32 %v637, %v600
        %v639 = vmul.f32 %v638, %v637
        %v640 = vmul.f32 0.5, %v639
        %v641 = vsub.f32 1.5, %v640
        %v642 = vmul.f32 %v637, %v641
        %vm643 = vweird.f32 %v600
        %vm644 = vweird.f32 %v637
        %vm645 = vmor %vm643, %vm644
        %v646 = vsel %vm645, %v637, %v642
        %v647 = vrsqrt.pop %v601
        %v648 = vmul.f32 %v647, %v601
        %v649 = vmul.f32 %v648, %v647
        %v650 = vmul.f32 0.5, %v649
        %v651 = vsub.f32 1.5, %v650
        %v652 = vmul.f32 %v647, %v651
        %vm653 = vweird.f32 %v601
        %vm654 = vweird.f32 %v647
        %vm655 = vmor %vm653, %vm654
        %v656 = vsel %vm655, %v647, %v652
        %v657 = vrsqrt.pop %v602
        %v658 = vmul.f32 %v657, %v602
        %v659 = vmul.f32 %v658, %v657
        %v660 = vmul.f32 0.5, %v659
        %v661 = vsub.f32 1.5, %v660
        %v662 = vmul.f32 %v657, %v661
        %vm663 = vweird.f32 %v602
        %vm664 = vweird.f32 %v657
        %vm665 = vmor %vm663, %vm664
        %v666 = vsel %vm665, %v657, %v662
        %v667 = vrsqrt.pop %v603
        %v668 = vmul.f32 %v667, %v603
        %v669 = vmul.f32 %v668, %v667
        %v670 = vmul.f32 0.5, %v669
        %v671 = vsub.f32 1.5, %v670
        %v672 = vmul.f32 %v667, %v671
        %vm673 = vweird.f32 %v603
        %vm674 = vweird.f32 %v667
        %vm675 = vmor %vm673, %vm674
        %v676 = vsel %vm675, %v667, %v672
        %v677 = vrsqrt.pop %v604
        %v678 = vmul.f32 %v677, %v604
        %v679 = vmul.f32 %v678, %v677
        %v680 = vmul.f32 0.5, %v679
        %v681 = vsub.f32 1.5, %v680
        %v682 = vmul.f32 %v677, %v681
        %vm683 = vweird.f32 %v604
        %vm684 = vweird.f32 %v677
        %vm685 = vmor %vm683, %vm684
        %v686 = vsel %vm685, %v677, %v682
        %v687 = vrsqrt.pop %v605
        %v688 = vmul.f32 %v687, %v605
        %v689 = vmul.f32 %v688, %v687
        %v690 = vmul.f32 0.5, %v689
        %v691 = vsub.f32 1.5, %v690
        %v692 = vmul.f32 %v687, %v691
        %vm693 = vweird.f32 %v605
        %vm694 = vweird.f32 %v687
        %vm695 = vmor %vm693, %vm694
        %v696 = vsel %vm695, %v687, %v692
        %v697 = vrsqrt.pop %v606
        %v698 = vmul.f32 %v697, %v606
        %v699 = vmul.f32 %v698, %v697
        %v700 = vmul.f32 0.5, %v699
        %v701 = vsub.f32 1.5, %v700
        %v702 = vmul.f32 %v697, %v701
        %vm703 = vweird.f32 %v606
        %vm704 = vweird.f32 %v697
        %vm705 = vmor %vm703, %vm704
        %v706 = vsel %vm705, %v697, %v702
        %v707 = vmul.f32 %v337, %v616
        %v708 = vmul.f32 %v338, %v616
        %v709 = vmul.f32 %v339, %v626
        %v710 = vmul.f32 %v340, %v626
        %v711 = vmul.f32 %v341, %v636
        %v712 = vmul.f32 %v342, %v636
        %v713 = vmul.f32 %v343, %v646
        %v714 = vmul.f32 %v344, %v646
        %v715 = vmul.f32 %v345, %v656
        %v716 = vmul.f32 %v346, %v656
        %v717 = vmul.f32 %v347, %v666
        %v718 = vmul.f32 %v348, %v666
        %v719 = vmul.f32 %v349, %v676
        %v720 = vmul.f32 %v350, %v676
        %v721 = vmul.f32 %v351, %v686
        %v722 = vmul.f32 %v352, %v686
        %v723 = vmul.f32 %v353, %v696
        %v724 = vmul.f32 %v354, %v696
        %v725 = vmul.f32 %v355, %v706
        %v726 = vmul.f32 %v356, %v706
        %v727 = vpack.c.bf16 %v579, %v577
        %v728 = vpack.c.bf16 %v580, %v578
        %v729 = vpack.c.bf16 %v583, %v581
        %v730 = vpack.c.bf16 %v584, %v582
        %v731 = vpack.c.bf16 %v587, %v585
        %v732 = vpack.c.bf16 %v588, %v586
        %v733 = vpack.c.bf16 %v591, %v589
        %v734 = vpack.c.bf16 %v592, %v590
        %v735 = vpack.c.bf16 %v595, %v593
        %v736 = vpack.c.bf16 %v596, %v594
        %v737 = vpack.c.bf16 %v709, %v707
        %v738 = vpack.c.bf16 %v710, %v708
        %v739 = vpack.c.bf16 %v713, %v711
        %v740 = vpack.c.bf16 %v714, %v712
        %v741 = vpack.c.bf16 %v717, %v715
        %v742 = vpack.c.bf16 %v718, %v716
        %v743 = vpack.c.bf16 %v721, %v719
        %v744 = vpack.c.bf16 %v722, %v720
        %v745 = vpack.c.bf16 %v725, %v723
        %v746 = vpack.c.bf16 %v726, %v724
        %747 = vmatpush.bf16.xpose.msra.mxu0 0
        %748 = vmatpush.bf16.xpose.msra.mxu0 0
        %749 = vmatpush.bf16.xpose.msra.mxu0 0
        %750 = vmatpush.bf16.xpose.msra.mxu0 %v745
        %751 = vmatpush.bf16.xpose.msra.mxu0 %v743
        %752 = vmatpush.bf16.xpose.msra.mxu0 %v741
        %753 = vmatpush.bf16.xpose.msra.mxu0 %v739
        %754 = vmatpush.bf16.xpose.msra.mxu0 %v737
        %755 = vmatmul.bf16.gmra.mxu0 %v727
        %v756 = vpop.f32.mrf.mxu0
        %v757 = vadd.f32 0.0, %v756
        %v758 = vpop.f32.mrf.mxu0
        %v759 = vadd.f32 0.0, %v758
        %760 = vmatmul.bf16.gmra.mxu0 %v729
        %v761 = vpop.f32.mrf.mxu0
        %v762 = vadd.f32 0.0, %v761
        %v763 = vpop.f32.mrf.mxu0
        %v764 = vadd.f32 0.0, %v763
        %765 = vmatmul.bf16.gmra.mxu0 %v731
        %v766 = vpop.f32.mrf.mxu0
        %v767 = vadd.f32 0.0, %v766
        %v768 = vpop.f32.mrf.mxu0
        %v769 = vadd.f32 0.0, %v768
        %770 = vmatmul.bf16.gmra.mxu0 %v733
        %v771 = vpop.f32.mrf.mxu0
        %v772 = vadd.f32 0.0, %v771
        %v773 = vpop.f32.mrf.mxu0
        %v774 = vadd.f32 0.0, %v773
        %775 = vmatmul.bf16.gmra.mxu0 %v735
        %v776 = vpop.f32.mrf.mxu0
        %v777 = vadd.f32 0.0, %v776
        %v778 = vpop.f32.mrf.mxu0
        %v779 = vadd.f32 0.0, %v778
        %780 = vdwg.mxu0
        %781 = vmatpush.bf16.xpose.msra.mxu0 0
        %782 = vmatpush.bf16.xpose.msra.mxu0 0
        %783 = vmatpush.bf16.xpose.msra.mxu0 0
        %784 = vmatpush.bf16.xpose.msra.mxu0 %v746
        %785 = vmatpush.bf16.xpose.msra.mxu0 %v744
        %786 = vmatpush.bf16.xpose.msra.mxu0 %v742
        %787 = vmatpush.bf16.xpose.msra.mxu0 %v740
        %788 = vmatpush.bf16.xpose.msra.mxu0 %v738
        %789 = vmatmul.bf16.gmra.mxu0 %v728
        %v790 = vpop.f32.mrf.mxu0
        %v791 = vadd.f32 %v757, %v790
        %v792 = vpop.f32.mrf.mxu0
        %v793 = vadd.f32 %v759, %v792
        %794 = vmatmul.bf16.gmra.mxu0 %v730
        %v795 = vpop.f32.mrf.mxu0
        %v796 = vadd.f32 %v762, %v795
        %v797 = vpop.f32.mrf.mxu0
        %v798 = vadd.f32 %v764, %v797
        %799 = vmatmul.bf16.gmra.mxu0 %v732
        %v800 = vpop.f32.mrf.mxu0
        %v801 = vadd.f32 %v767, %v800
        %v802 = vpop.f32.mrf.mxu0
        %v803 = vadd.f32 %v769, %v802
        %804 = vmatmul.bf16.gmra.mxu0 %v734
        %v805 = vpop.f32.mrf.mxu0
        %v806 = vadd.f32 %v772, %v805
        %v807 = vpop.f32.mrf.mxu0
        %v808 = vadd.f32 %v774, %v807
        %809 = vmatmul.bf16.gmra.mxu0 %v736
        %v810 = vpop.f32.mrf.mxu0
        %v811 = vadd.f32 %v777, %v810
        %v812 = vpop.f32.mrf.mxu0
        %v813 = vadd.f32 %v779, %v812
        %814 = vdwg.mxu0
        %vm815 = vcmask 654336
        %v816 = vsel %vm815, %v791, 0.0
        %817 = vadd.xlane.f32.xlu0 %v816
        %v818 = vpop.xlane.xlu0 %817
        %v819 = vsel %vm815, %v793, 0.0
        %820 = vadd.xlane.f32.xlu0 %v819
        %v821 = vpop.xlane.xlu0 %820
        %v822 = vsel %vm815, %v796, 0.0
        %823 = vadd.xlane.f32.xlu0 %v822
        %v824 = vpop.xlane.xlu0 %823
        %v825 = vsel %vm815, %v798, 0.0
        %826 = vadd.xlane.f32.xlu0 %v825
        %v827 = vpop.xlane.xlu0 %826
        %v828 = vsel %vm815, %v801, 0.0
        %829 = vadd.xlane.f32.xlu0 %v828
        %v830 = vpop.xlane.xlu0 %829
        %v831 = vsel %vm815, %v803, 0.0
        %832 = vadd.xlane.f32.xlu0 %v831
        %v833 = vpop.xlane.xlu0 %832
        %v834 = vsel %vm815, %v806, 0.0
        %835 = vadd.xlane.f32.xlu0 %v834
        %v836 = vpop.xlane.xlu0 %835
        %v837 = vsel %vm815, %v808, 0.0
        %838 = vadd.xlane.f32.xlu0 %v837
        %v839 = vpop.xlane.xlu0 %838
        %v840 = vsel %vm815, %v811, 0.0
        %841 = vadd.xlane.f32.xlu0 %v840
        %v842 = vpop.xlane.xlu0 %841
        %v843 = vsel %vm815, %v813, 0.0
        %844 = vadd.xlane.f32.xlu0 %v843
        %v845 = vpop.xlane.xlu0 %844
        %v846 = vmul.f32 %v791, %v791
        %v847 = vmul.f32 %v793, %v793
        %v848 = vmul.f32 %v796, %v796
        %v849 = vmul.f32 %v798, %v798
        %v850 = vmul.f32 %v801, %v801
        %v851 = vmul.f32 %v803, %v803
        %v852 = vmul.f32 %v806, %v806
        %v853 = vmul.f32 %v808, %v808
        %v854 = vmul.f32 %v811, %v811
        %v855 = vmul.f32 %v813, %v813
        %v856 = vsel %vm815, %v846, 0.0
        %857 = vadd.xlane.f32.xlu0 %v856
        %v858 = vpop.xlane.xlu0 %857
        %v859 = vsel %vm815, %v847, 0.0
        %860 = vadd.xlane.f32.xlu0 %v859
        %v861 = vpop.xlane.xlu0 %860
        %v862 = vsel %vm815, %v848, 0.0
        %863 = vadd.xlane.f32.xlu0 %v862
        %v864 = vpop.xlane.xlu0 %863
        %v865 = vsel %vm815, %v849, 0.0
        %866 = vadd.xlane.f32.xlu0 %v865
        %v867 = vpop.xlane.xlu0 %866
        %v868 = vsel %vm815, %v850, 0.0
        %869 = vadd.xlane.f32.xlu0 %v868
        %v870 = vpop.xlane.xlu0 %869
        %v871 = vsel %vm815, %v851, 0.0
        %872 = vadd.xlane.f32.xlu0 %v871
        %v873 = vpop.xlane.xlu0 %872
        %v874 = vsel %vm815, %v852, 0.0
        %875 = vadd.xlane.f32.xlu0 %v874
        %v876 = vpop.xlane.xlu0 %875
        %v877 = vsel %vm815, %v853, 0.0
        %878 = vadd.xlane.f32.xlu0 %v877
        %v879 = vpop.xlane.xlu0 %878
        %v880 = vsel %vm815, %v854, 0.0
        %881 = vadd.xlane.f32.xlu0 %v880
        %v882 = vpop.xlane.xlu0 %881
        %v883 = vsel %vm815, %v855, 0.0
        %884 = vadd.xlane.f32.xlu0 %v883
        %v885 = vpop.xlane.xlu0 %884
        %v886 = vlaneseq
        %v887 = vshrl.u32 %v886, 7
        %v888 = vadd.s32 %v887, 8
        %v889 = vadd.s32 %v887, 16
        %v890 = vadd.s32 %v887, 24
        %v891 = vadd.s32 %v887, 32
        %v892 = vadd.s32 %v887, 40
        %v893 = vadd.s32 %v887, 48
        %v894 = vadd.s32 %v887, 56
        %v895 = vadd.s32 %v887, 64
        %v896 = vadd.s32 %v887, 72
        %vm897 = vcmp.ge.s32.totalorder %v887, 0
        %vm898 = vcmp.ge.s32.totalorder %v888, 0
        %vm899 = vcmp.ge.s32.totalorder %v889, 0
        %vm900 = vcmp.ge.s32.totalorder %v890, 0
        %vm901 = vcmp.ge.s32.totalorder %v891, 0
        %vm902 = vcmp.ge.s32.totalorder %v892, 0
        %vm903 = vcmp.ge.s32.totalorder %v893, 0
        %vm904 = vcmp.ge.s32.totalorder %v894, 0
        %vm905 = vcmp.ge.s32.totalorder %v895, 0
        %vm906 = vcmp.ge.s32.totalorder %v896, 0
        %vm907 = vcmp.lt.s32.totalorder %v887, 8
        %vm908 = vcmp.lt.s32.totalorder %v888, 8
        %vm909 = vcmp.lt.s32.totalorder %v889, 8
        %vm910 = vcmp.lt.s32.totalorder %v890, 8
        %vm911 = vcmp.lt.s32.totalorder %v891, 8
        %vm912 = vcmp.lt.s32.totalorder %v892, 8
        %vm913 = vcmp.lt.s32.totalorder %v893, 8
        %vm914 = vcmp.lt.s32.totalorder %v894, 8
        %vm915 = vcmp.lt.s32.totalorder %v895, 8
        %vm916 = vcmp.lt.s32.totalorder %v896, 8
        %vm917 = vmand %vm897, %vm907
        %vm918 = vmand %vm898, %vm908
        %vm919 = vmand %vm899, %vm909
        %vm920 = vmand %vm900, %vm910
        %vm921 = vmand %vm901, %vm911
        %vm922 = vmand %vm902, %vm912
        %vm923 = vmand %vm903, %vm913
        %vm924 = vmand %vm904, %vm914
        %vm925 = vmand %vm905, %vm915
        %vm926 = vmand %vm906, %vm916
        %v927 = vsel %vm917, 1, 0
        %v928 = vsel %vm918, 1, 0
        %v929 = vsel %vm919, 1, 0
        %v930 = vsel %vm920, 1, 0
        %v931 = vsel %vm921, 1, 0
        %v932 = vsel %vm922, 1, 0
        %v933 = vsel %vm923, 1, 0
        %v934 = vsel %vm924, 1, 0
        %v935 = vsel %vm925, 1, 0
        %v936 = vsel %vm926, 1, 0
        %v937 = vcvt.s32.f32 %v927
        %v938 = vcvt.s32.f32 %v928
        %v939 = vcvt.s32.f32 %v929
        %v940 = vcvt.s32.f32 %v930
        %v941 = vcvt.s32.f32 %v931
        %v942 = vcvt.s32.f32 %v932
        %v943 = vcvt.s32.f32 %v933
        %v944 = vcvt.s32.f32 %v934
        %v945 = vcvt.s32.f32 %v935
        %v946 = vcvt.s32.f32 %v936
        %v947 = vmul.f32 %v818, %v937
        %v948 = vmul.f32 %v821, %v938
        %v949 = vmul.f32 %v824, %v939
        %v950 = vmul.f32 %v827, %v940
        %v951 = vmul.f32 %v830, %v941
        %v952 = vmul.f32 %v833, %v942
        %v953 = vmul.f32 %v836, %v943
        %v954 = vmul.f32 %v839, %v944
        %v955 = vmul.f32 %v842, %v945
        %v956 = vmul.f32 %v845, %v946
        %vm957 = vcmask 7168
        %v958 = vsel %vm957, %v947, 0.0
        %v959 = vsel %vm957, %v948, 0.0
        %v960 = vadd.f32 %v958, %v959
        %v961 = vsel %vm957, %v949, 0.0
        %v962 = vadd.f32 %v960, %v961
        %v963 = vsel %vm957, %v950, 0.0
        %v964 = vadd.f32 %v962, %v963
        %v965 = vsel %vm957, %v951, 0.0
        %v966 = vadd.f32 %v964, %v965
        %v967 = vsel %vm957, %v952, 0.0
        %v968 = vadd.f32 %v966, %v967
        %v969 = vsel %vm957, %v953, 0.0
        %v970 = vadd.f32 %v968, %v969
        %v971 = vsel %vm957, %v954, 0.0
        %v972 = vadd.f32 %v970, %v971
        %v973 = vsel %vm957, %v955, 0.0
        %v974 = vadd.f32 %v972, %v973
        %v975 = vsel %vm957, %v956, 0.0
        %v976 = vadd.f32 %v974, %v975
        %977 = vadd.xlane.f32.xlu0 %v976
        %v978 = vpop.xlane.xlu0 %977
        %v979 = vrot.slane %v978, 4
        %v980 = vadd.f32 %v978, %v979
        %v981 = vrot.slane %v980, 2
        %v982 = vadd.f32 %v980, %v981
        %v983 = vrot.slane %v982, 1
        %v984 = vadd.f32 %v982, %v983
        %s985 = vtos %v984
        %v986 = vrcp.pop 640.0
        %v987 = vmul.f32 640.0, %v986
        %v988 = vsub.f32 1.0, %v987
        %v989 = vmul.f32 %v986, %v988
        %v990 = vadd.f32 %v986, %v989
        %vm991 = vweird.f32 %v986
        %v992 = vsel %vm991, %v986, %v990
        %s993 = vtos %v992
        %s994 = smul.f32 %s985, %s993
        %v995 = vmul.f32 %v858, %v937
        %v996 = vmul.f32 %v861, %v938
        %v997 = vmul.f32 %v864, %v939
        %v998 = vmul.f32 %v867, %v940
        %v999 = vmul.f32 %v870, %v941
        %v1000 = vmul.f32 %v873, %v942
        %v1001 = vmul.f32 %v876, %v943
        %v1002 = vmul.f32 %v879, %v944
        %v1003 = vmul.f32 %v882, %v945
        %v1004 = vmul.f32 %v885, %v946
        %v1005 = vsel %vm957, %v995, 0.0
        %v1006 = vsel %vm957, %v996, 0.0
        %v1007 = vadd.f32 %v1005, %v1006
        %v1008 = vsel %vm957, %v997, 0.0
        %v1009 = vadd.f32 %v1007, %v1008
        %v1010 = vsel %vm957, %v998, 0.0
        %v1011 = vadd.f32 %v1009, %v1010
        %v1012 = vsel %vm957, %v999, 0.0
        %v1013 = vadd.f32 %v1011, %v1012
        %v1014 = vsel %vm957, %v1000, 0.0
        %v1015 = vadd.f32 %v1013, %v1014
        %v1016 = vsel %vm957, %v1001, 0.0
        %v1017 = vadd.f32 %v1015, %v1016
        %v1018 = vsel %vm957, %v1002, 0.0
        %v1019 = vadd.f32 %v1017, %v1018
        %v1020 = vsel %vm957, %v1003, 0.0
        %v1021 = vadd.f32 %v1019, %v1020
        %v1022 = vsel %vm957, %v1004, 0.0
        %v1023 = vadd.f32 %v1021, %v1022
        %1024 = vadd.xlane.f32.xlu0 %v1023
        %v1025 = vpop.xlane.xlu0 %1024
        %v1026 = vrot.slane %v1025, 4
        %v1027 = vadd.f32 %v1025, %v1026
        %v1028 = vrot.slane %v1027, 2
        %v1029 = vadd.f32 %v1027, %v1028
        %v1030 = vrot.slane %v1029, 1
        %v1031 = vadd.f32 %v1029, %v1030
        %s1032 = vtos %v1031
        %v1033 = vrcp.pop 640.0
        %v1034 = vmul.f32 640.0, %v1033
        %v1035 = vsub.f32 1.0, %v1034
        %v1036 = vmul.f32 %v1033, %v1035
        %v1037 = vadd.f32 %v1033, %v1036
        %vm1038 = vweird.f32 %v1033
        %v1039 = vsel %vm1038, %v1033, %v1037
        %s1040 = vtos %v1039
        %s1041 = smul.f32 %s1032, %s1040
        %s1042 = smul.f32 %s994, %s994
        %s1043 = ssub.f32 %s1041, %s1042
        %s1044 = smax.f32 %s1043, 0.0
        %s1045 = sadd.f32 %s1044, 1e-05
        %v1046 = vstv %s1045
        %v1047 = vrsqrt.pop %v1046
        %v1048 = vmul.f32 %v1047, %v1046
        %v1049 = vmul.f32 %v1048, %v1047
        %v1050 = vmul.f32 0.5, %v1049
        %v1051 = vsub.f32 1.5, %v1050
        %v1052 = vmul.f32 %v1047, %v1051
        %vm1053 = vweird.f32 %v1046
        %vm1054 = vweird.f32 %v1047
        %vm1055 = vmor %vm1053, %vm1054
        %v1056 = vsel %vm1055, %v1047, %v1052
        %s1057 = vtos %v1056
        %v1058 = vstv %s994
        %v1059 = vmul.f32 %v937, %v1058
        %v1060 = vmul.f32 %v938, %v1058
        %v1061 = vmul.f32 %v939, %v1058
        %v1062 = vmul.f32 %v940, %v1058
        %v1063 = vmul.f32 %v941, %v1058
        %v1064 = vmul.f32 %v942, %v1058
        %v1065 = vmul.f32 %v943, %v1058
        %v1066 = vmul.f32 %v944, %v1058
        %v1067 = vmul.f32 %v945, %v1058
        %v1068 = vmul.f32 %v946, %v1058
        %v1069 = vadd.f32 %v1059, 0.0
        %v1070 = vadd.f32 %v1060, 0.0
        %v1071 = vadd.f32 %v1061, 0.0
        %v1072 = vadd.f32 %v1062, 0.0
        %v1073 = vadd.f32 %v1063, 0.0
        %v1074 = vadd.f32 %v1064, 0.0
        %v1075 = vadd.f32 %v1065, 0.0
        %v1076 = vadd.f32 %v1066, 0.0
        %v1077 = vadd.f32 %v1067, 0.0
        %v1078 = vadd.f32 %v1068, 0.0
        %v1079 = vstv %s1057
        %v1080 = vmul.f32 %v937, %v1079
        %v1081 = vmul.f32 %v938, %v1079
        %v1082 = vmul.f32 %v939, %v1079
        %v1083 = vmul.f32 %v940, %v1079
        %v1084 = vmul.f32 %v941, %v1079
        %v1085 = vmul.f32 %v942, %v1079
        %v1086 = vmul.f32 %v943, %v1079
        %v1087 = vmul.f32 %v944, %v1079
        %v1088 = vmul.f32 %v945, %v1079
        %v1089 = vmul.f32 %v946, %v1079
        %v1090 = vadd.f32 %v1080, 0.0
        %v1091 = vadd.f32 %v1081, 0.0
        %v1092 = vadd.f32 %v1082, 0.0
        %v1093 = vadd.f32 %v1083, 0.0
        %v1094 = vadd.f32 %v1084, 0.0
        %v1095 = vadd.f32 %v1085, 0.0
        %v1096 = vadd.f32 %v1086, 0.0
        %v1097 = vadd.f32 %v1087, 0.0
        %v1098 = vadd.f32 %v1088, 0.0
        %v1099 = vadd.f32 %v1089, 0.0
        %vm1100 = vcmp.ge.s32.totalorder %v887, 8
        %vm1101 = vcmp.ge.s32.totalorder %v888, 8
        %vm1102 = vcmp.ge.s32.totalorder %v889, 8
        %vm1103 = vcmp.ge.s32.totalorder %v890, 8
        %vm1104 = vcmp.ge.s32.totalorder %v891, 8
        %vm1105 = vcmp.ge.s32.totalorder %v892, 8
        %vm1106 = vcmp.ge.s32.totalorder %v893, 8
        %vm1107 = vcmp.ge.s32.totalorder %v894, 8
        %vm1108 = vcmp.ge.s32.totalorder %v895, 8
        %vm1109 = vcmp.ge.s32.totalorder %v896, 8
        %vm1110 = vcmp.lt.s32.totalorder %v887, 24
        %vm1111 = vcmp.lt.s32.totalorder %v888, 24
        %vm1112 = vcmp.lt.s32.totalorder %v889, 24
        %vm1113 = vcmp.lt.s32.totalorder %v890, 24
        %vm1114 = vcmp.lt.s32.totalorder %v891, 24
        %vm1115 = vcmp.lt.s32.totalorder %v892, 24
        %vm1116 = vcmp.lt.s32.totalorder %v893, 24
        %vm1117 = vcmp.lt.s32.totalorder %v894, 24
        %vm1118 = vcmp.lt.s32.totalorder %v895, 24
        %vm1119 = vcmp.lt.s32.totalorder %v896, 24
        %vm1120 = vmand %vm1100, %vm1110
        %vm1121 = vmand %vm1101, %vm1111
        %vm1122 = vmand %vm1102, %vm1112
        %vm1123 = vmand %vm1103, %vm1113
        %vm1124 = vmand %vm1104, %vm1114
        %vm1125 = vmand %vm1105, %vm1115
        %vm1126 = vmand %vm1106, %vm1116
        %vm1127 = vmand %vm1107, %vm1117
        %vm1128 = vmand %vm1108, %vm1118
        %vm1129 = vmand %vm1109, %vm1119
        %v1130 = vsel %vm1120, 1, 0
        %v1131 = vsel %vm1121, 1, 0
        %v1132 = vsel %vm1122, 1, 0
        %v1133 = vsel %vm1123, 1, 0
        %v1134 = vsel %vm1124, 1, 0
        %v1135 = vsel %vm1125, 1, 0
        %v1136 = vsel %vm1126, 1, 0
        %v1137 = vsel %vm1127, 1, 0
        %v1138 = vsel %vm1128, 1, 0
        %v1139 = vsel %vm1129, 1, 0
        %v1140 = vcvt.s32.f32 %v1130
        %v1141 = vcvt.s32.f32 %v1131
        %v1142 = vcvt.s32.f32 %v1132
        %v1143 = vcvt.s32.f32 %v1133
        %v1144 = vcvt.s32.f32 %v1134
        %v1145 = vcvt.s32.f32 %v1135
        %v1146 = vcvt.s32.f32 %v1136
        %v1147 = vcvt.s32.f32 %v1137
        %v1148 = vcvt.s32.f32 %v1138
        %v1149 = vcvt.s32.f32 %v1139
        %v1150 = vmul.f32 %v818, %v1140
        %v1151 = vmul.f32 %v821, %v1141
        %v1152 = vmul.f32 %v824, %v1142
        %v1153 = vmul.f32 %v827, %v1143
        %v1154 = vmul.f32 %v830, %v1144
        %v1155 = vmul.f32 %v833, %v1145
        %v1156 = vmul.f32 %v836, %v1146
        %v1157 = vmul.f32 %v839, %v1147
        %v1158 = vmul.f32 %v842, %v1148
        %v1159 = vmul.f32 %v845, %v1149
        %v1160 = vsel %vm957, %v1150, 0.0
        %v1161 = vsel %vm957, %v1151, 0.0
        %v1162 = vadd.f32 %v1160, %v1161
        %v1163 = vsel %vm957, %v1152, 0.0
        %v1164 = vadd.f32 %v1162, %v1163
        %v1165 = vsel %vm957, %v1153, 0.0
        %v1166 = vadd.f32 %v1164, %v1165
        %v1167 = vsel %vm957, %v1154, 0.0
        %v1168 = vadd.f32 %v1166, %v1167
        %v1169 = vsel %vm957, %v1155, 0.0
        %v1170 = vadd.f32 %v1168, %v1169
        %v1171 = vsel %vm957, %v1156, 0.0
        %v1172 = vadd.f32 %v1170, %v1171
        %v1173 = vsel %vm957, %v1157, 0.0
        %v1174 = vadd.f32 %v1172, %v1173
        %v1175 = vsel %vm957, %v1158, 0.0
        %v1176 = vadd.f32 %v1174, %v1175
        %v1177 = vsel %vm957, %v1159, 0.0
        %v1178 = vadd.f32 %v1176, %v1177
        %1179 = vadd.xlane.f32.xlu0 %v1178
        %v1180 = vpop.xlane.xlu0 %1179
        %v1181 = vrot.slane %v1180, 4
        %v1182 = vadd.f32 %v1180, %v1181
        %v1183 = vrot.slane %v1182, 2
        %v1184 = vadd.f32 %v1182, %v1183
        %v1185 = vrot.slane %v1184, 1
        %v1186 = vadd.f32 %v1184, %v1185
        %s1187 = vtos %v1186
        %v1188 = vrcp.pop 1280.0
        %v1189 = vmul.f32 1280.0, %v1188
        %v1190 = vsub.f32 1.0, %v1189
        %v1191 = vmul.f32 %v1188, %v1190
        %v1192 = vadd.f32 %v1188, %v1191
        %vm1193 = vweird.f32 %v1188
        %v1194 = vsel %vm1193, %v1188, %v1192
        %s1195 = vtos %v1194
        %s1196 = smul.f32 %s1187, %s1195
        %v1197 = vmul.f32 %v858, %v1140
        %v1198 = vmul.f32 %v861, %v1141
        %v1199 = vmul.f32 %v864, %v1142
        %v1200 = vmul.f32 %v867, %v1143
        %v1201 = vmul.f32 %v870, %v1144
        %v1202 = vmul.f32 %v873, %v1145
        %v1203 = vmul.f32 %v876, %v1146
        %v1204 = vmul.f32 %v879, %v1147
        %v1205 = vmul.f32 %v882, %v1148
        %v1206 = vmul.f32 %v885, %v1149
        %v1207 = vsel %vm957, %v1197, 0.0
        %v1208 = vsel %vm957, %v1198, 0.0
        %v1209 = vadd.f32 %v1207, %v1208
        %v1210 = vsel %vm957, %v1199, 0.0
        %v1211 = vadd.f32 %v1209, %v1210
        %v1212 = vsel %vm957, %v1200, 0.0
        %v1213 = vadd.f32 %v1211, %v1212
        %v1214 = vsel %vm957, %v1201, 0.0
        %v1215 = vadd.f32 %v1213, %v1214
        %v1216 = vsel %vm957, %v1202, 0.0
        %v1217 = vadd.f32 %v1215, %v1216
        %v1218 = vsel %vm957, %v1203, 0.0
        %v1219 = vadd.f32 %v1217, %v1218
        %v1220 = vsel %vm957, %v1204, 0.0
        %v1221 = vadd.f32 %v1219, %v1220
        %v1222 = vsel %vm957, %v1205, 0.0
        %v1223 = vadd.f32 %v1221, %v1222
        %v1224 = vsel %vm957, %v1206, 0.0
        %v1225 = vadd.f32 %v1223, %v1224
        %1226 = vadd.xlane.f32.xlu0 %v1225
        %v1227 = vpop.xlane.xlu0 %1226
        %v1228 = vrot.slane %v1227, 4
        %v1229 = vadd.f32 %v1227, %v1228
        %v1230 = vrot.slane %v1229, 2
        %v1231 = vadd.f32 %v1229, %v1230
        %v1232 = vrot.slane %v1231, 1
        %v1233 = vadd.f32 %v1231, %v1232
        %s1234 = vtos %v1233
        %v1235 = vrcp.pop 1280.0
        %v1236 = vmul.f32 1280.0, %v1235
        %v1237 = vsub.f32 1.0, %v1236
        %v1238 = vmul.f32 %v1235, %v1237
        %v1239 = vadd.f32 %v1235, %v1238
        %vm1240 = vweird.f32 %v1235
        %v1241 = vsel %vm1240, %v1235, %v1239
        %s1242 = vtos %v1241
        %s1243 = smul.f32 %s1234, %s1242
        %s1244 = smul.f32 %s1196, %s1196
        %s1245 = ssub.f32 %s1243, %s1244
        %s1246 = smax.f32 %s1245, 0.0
        %s1247 = sadd.f32 %s1246, 1e-05
        %v1248 = vstv %s1247
        %v1249 = vrsqrt.pop %v1248
        %v1250 = vmul.f32 %v1249, %v1248
        %v1251 = vmul.f32 %v1250, %v1249
        %v1252 = vmul.f32 0.5, %v1251
        %v1253 = vsub.f32 1.5, %v1252
        %v1254 = vmul.f32 %v1249, %v1253
        %vm1255 = vweird.f32 %v1248
        %vm1256 = vweird.f32 %v1249
        %vm1257 = vmor %vm1255, %vm1256
        %v1258 = vsel %vm1257, %v1249, %v1254
        %s1259 = vtos %v1258
        %v1260 = vstv %s1196
        %v1261 = vmul.f32 %v1140, %v1260
        %v1262 = vmul.f32 %v1141, %v1260
        %v1263 = vmul.f32 %v1142, %v1260
        %v1264 = vmul.f32 %v1143, %v1260
        %v1265 = vmul.f32 %v1144, %v1260
        %v1266 = vmul.f32 %v1145, %v1260
        %v1267 = vmul.f32 %v1146, %v1260
        %v1268 = vmul.f32 %v1147, %v1260
        %v1269 = vmul.f32 %v1148, %v1260
        %v1270 = vmul.f32 %v1149, %v1260
        %v1271 = vadd.f32 %v1069, %v1261
        %v1272 = vadd.f32 %v1070, %v1262
        %v1273 = vadd.f32 %v1071, %v1263
        %v1274 = vadd.f32 %v1072, %v1264
        %v1275 = vadd.f32 %v1073, %v1265
        %v1276 = vadd.f32 %v1074, %v1266
        %v1277 = vadd.f32 %v1075, %v1267
        %v1278 = vadd.f32 %v1076, %v1268
        %v1279 = vadd.f32 %v1077, %v1269
        %v1280 = vadd.f32 %v1078, %v1270
        %v1281 = vstv %s1259
        %v1282 = vmul.f32 %v1140, %v1281
        %v1283 = vmul.f32 %v1141, %v1281
        %v1284 = vmul.f32 %v1142, %v1281
        %v1285 = vmul.f32 %v1143, %v1281
        %v1286 = vmul.f32 %v1144, %v1281
        %v1287 = vmul.f32 %v1145, %v1281
        %v1288 = vmul.f32 %v1146, %v1281
        %v1289 = vmul.f32 %v1147, %v1281
        %v1290 = vmul.f32 %v1148, %v1281
        %v1291 = vmul.f32 %v1149, %v1281
        %v1292 = vadd.f32 %v1090, %v1282
        %v1293 = vadd.f32 %v1091, %v1283
        %v1294 = vadd.f32 %v1092, %v1284
        %v1295 = vadd.f32 %v1093, %v1285
        %v1296 = vadd.f32 %v1094, %v1286
        %v1297 = vadd.f32 %v1095, %v1287
        %v1298 = vadd.f32 %v1096, %v1288
        %v1299 = vadd.f32 %v1097, %v1289
        %v1300 = vadd.f32 %v1098, %v1290
        %v1301 = vadd.f32 %v1099, %v1291
        %vm1302 = vcmp.ge.s32.totalorder %v887, 24
        %vm1303 = vcmp.ge.s32.totalorder %v888, 24
        %vm1304 = vcmp.ge.s32.totalorder %v889, 24
        %vm1305 = vcmp.ge.s32.totalorder %v890, 24
        %vm1306 = vcmp.ge.s32.totalorder %v891, 24
        %vm1307 = vcmp.ge.s32.totalorder %v892, 24
        %vm1308 = vcmp.ge.s32.totalorder %v893, 24
        %vm1309 = vcmp.ge.s32.totalorder %v894, 24
        %vm1310 = vcmp.ge.s32.totalorder %v895, 24
        %vm1311 = vcmp.ge.s32.totalorder %v896, 24
        %vm1312 = vcmp.lt.s32.totalorder %v887, 48
        %vm1313 = vcmp.lt.s32.totalorder %v888, 48
        %vm1314 = vcmp.lt.s32.totalorder %v889, 48
        %vm1315 = vcmp.lt.s32.totalorder %v890, 48
        %vm1316 = vcmp.lt.s32.totalorder %v891, 48
        %vm1317 = vcmp.lt.s32.totalorder %v892, 48
        %vm1318 = vcmp.lt.s32.totalorder %v893, 48
        %vm1319 = vcmp.lt.s32.totalorder %v894, 48
        %vm1320 = vcmp.lt.s32.totalorder %v895, 48
        %vm1321 = vcmp.lt.s32.totalorder %v896, 48
        %vm1322 = vmand %vm1302, %vm1312
        %vm1323 = vmand %vm1303, %vm1313
        %vm1324 = vmand %vm1304, %vm1314
        %vm1325 = vmand %vm1305, %vm1315
        %vm1326 = vmand %vm1306, %vm1316
        %vm1327 = vmand %vm1307, %vm1317
        %vm1328 = vmand %vm1308, %vm1318
        %vm1329 = vmand %vm1309, %vm1319
        %vm1330 = vmand %vm1310, %vm1320
        %vm1331 = vmand %vm1311, %vm1321
        %v1332 = vsel %vm1322, 1, 0
        %v1333 = vsel %vm1323, 1, 0
        %v1334 = vsel %vm1324, 1, 0
        %v1335 = vsel %vm1325, 1, 0
        %v1336 = vsel %vm1326, 1, 0
        %v1337 = vsel %vm1327, 1, 0
        %v1338 = vsel %vm1328, 1, 0
        %v1339 = vsel %vm1329, 1, 0
        %v1340 = vsel %vm1330, 1, 0
        %v1341 = vsel %vm1331, 1, 0
        %v1342 = vcvt.s32.f32 %v1332
        %v1343 = vcvt.s32.f32 %v1333
        %v1344 = vcvt.s32.f32 %v1334
        %v1345 = vcvt.s32.f32 %v1335
        %v1346 = vcvt.s32.f32 %v1336
        %v1347 = vcvt.s32.f32 %v1337
        %v1348 = vcvt.s32.f32 %v1338
        %v1349 = vcvt.s32.f32 %v1339
        %v1350 = vcvt.s32.f32 %v1340
        %v1351 = vcvt.s32.f32 %v1341
        %v1352 = vmul.f32 %v818, %v1342
        %v1353 = vmul.f32 %v821, %v1343
        %v1354 = vmul.f32 %v824, %v1344
        %v1355 = vmul.f32 %v827, %v1345
        %v1356 = vmul.f32 %v830, %v1346
        %v1357 = vmul.f32 %v833, %v1347
        %v1358 = vmul.f32 %v836, %v1348
        %v1359 = vmul.f32 %v839, %v1349
        %v1360 = vmul.f32 %v842, %v1350
        %v1361 = vmul.f32 %v845, %v1351
        %v1362 = vsel %vm957, %v1352, 0.0
        %v1363 = vsel %vm957, %v1353, 0.0
        %v1364 = vadd.f32 %v1362, %v1363
        %v1365 = vsel %vm957, %v1354, 0.0
        %v1366 = vadd.f32 %v1364, %v1365
        %v1367 = vsel %vm957, %v1355, 0.0
        %v1368 = vadd.f32 %v1366, %v1367
        %v1369 = vsel %vm957, %v1356, 0.0
        %v1370 = vadd.f32 %v1368, %v1369
        %v1371 = vsel %vm957, %v1357, 0.0
        %v1372 = vadd.f32 %v1370, %v1371
        %v1373 = vsel %vm957, %v1358, 0.0
        %v1374 = vadd.f32 %v1372, %v1373
        %v1375 = vsel %vm957, %v1359, 0.0
        %v1376 = vadd.f32 %v1374, %v1375
        %v1377 = vsel %vm957, %v1360, 0.0
        %v1378 = vadd.f32 %v1376, %v1377
        %v1379 = vsel %vm957, %v1361, 0.0
        %v1380 = vadd.f32 %v1378, %v1379
        %1381 = vadd.xlane.f32.xlu0 %v1380
        %v1382 = vpop.xlane.xlu0 %1381
        %v1383 = vrot.slane %v1382, 4
        %v1384 = vadd.f32 %v1382, %v1383
        %v1385 = vrot.slane %v1384, 2
        %v1386 = vadd.f32 %v1384, %v1385
        %v1387 = vrot.slane %v1386, 1
        %v1388 = vadd.f32 %v1386, %v1387
        %s1389 = vtos %v1388
        %v1390 = vrcp.pop 1920.0
        %v1391 = vmul.f32 1920.0, %v1390
        %v1392 = vsub.f32 1.0, %v1391
        %v1393 = vmul.f32 %v1390, %v1392
        %v1394 = vadd.f32 %v1390, %v1393
        %vm1395 = vweird.f32 %v1390
        %v1396 = vsel %vm1395, %v1390, %v1394
        %s1397 = vtos %v1396
        %s1398 = smul.f32 %s1389, %s1397
        %v1399 = vmul.f32 %v858, %v1342
        %v1400 = vmul.f32 %v861, %v1343
        %v1401 = vmul.f32 %v864, %v1344
        %v1402 = vmul.f32 %v867, %v1345
        %v1403 = vmul.f32 %v870, %v1346
        %v1404 = vmul.f32 %v873, %v1347
        %v1405 = vmul.f32 %v876, %v1348
        %v1406 = vmul.f32 %v879, %v1349
        %v1407 = vmul.f32 %v882, %v1350
        %v1408 = vmul.f32 %v885, %v1351
        %v1409 = vsel %vm957, %v1399, 0.0
        %v1410 = vsel %vm957, %v1400, 0.0
        %v1411 = vadd.f32 %v1409, %v1410
        %v1412 = vsel %vm957, %v1401, 0.0
        %v1413 = vadd.f32 %v1411, %v1412
        %v1414 = vsel %vm957, %v1402, 0.0
        %v1415 = vadd.f32 %v1413, %v1414
        %v1416 = vsel %vm957, %v1403, 0.0
        %v1417 = vadd.f32 %v1415, %v1416
        %v1418 = vsel %vm957, %v1404, 0.0
        %v1419 = vadd.f32 %v1417, %v1418
        %v1420 = vsel %vm957, %v1405, 0.0
        %v1421 = vadd.f32 %v1419, %v1420
        %v1422 = vsel %vm957, %v1406, 0.0
        %v1423 = vadd.f32 %v1421, %v1422
        %v1424 = vsel %vm957, %v1407, 0.0
        %v1425 = vadd.f32 %v1423, %v1424
        %v1426 = vsel %vm957, %v1408, 0.0
        %v1427 = vadd.f32 %v1425, %v1426
        %1428 = vadd.xlane.f32.xlu0 %v1427
        %v1429 = vpop.xlane.xlu0 %1428
        %v1430 = vrot.slane %v1429, 4
        %v1431 = vadd.f32 %v1429, %v1430
        %v1432 = vrot.slane %v1431, 2
        %v1433 = vadd.f32 %v1431, %v1432
        %v1434 = vrot.slane %v1433, 1
        %v1435 = vadd.f32 %v1433, %v1434
        %s1436 = vtos %v1435
        %v1437 = vrcp.pop 1920.0
        %v1438 = vmul.f32 1920.0, %v1437
        %v1439 = vsub.f32 1.0, %v1438
        %v1440 = vmul.f32 %v1437, %v1439
        %v1441 = vadd.f32 %v1437, %v1440
        %vm1442 = vweird.f32 %v1437
        %v1443 = vsel %vm1442, %v1437, %v1441
        %s1444 = vtos %v1443
        %s1445 = smul.f32 %s1436, %s1444
        %s1446 = smul.f32 %s1398, %s1398
        %s1447 = ssub.f32 %s1445, %s1446
        %s1448 = smax.f32 %s1447, 0.0
        %s1449 = sadd.f32 %s1448, 1e-05
        %v1450 = vstv %s1449
        %v1451 = vrsqrt.pop %v1450
        %v1452 = vmul.f32 %v1451, %v1450
        %v1453 = vmul.f32 %v1452, %v1451
        %v1454 = vmul.f32 0.5, %v1453
        %v1455 = vsub.f32 1.5, %v1454
        %v1456 = vmul.f32 %v1451, %v1455
        %vm1457 = vweird.f32 %v1450
        %vm1458 = vweird.f32 %v1451
        %vm1459 = vmor %vm1457, %vm1458
        %v1460 = vsel %vm1459, %v1451, %v1456
        %s1461 = vtos %v1460
        %v1462 = vstv %s1398
        %v1463 = vmul.f32 %v1342, %v1462
        %v1464 = vmul.f32 %v1343, %v1462
        %v1465 = vmul.f32 %v1344, %v1462
        %v1466 = vmul.f32 %v1345, %v1462
        %v1467 = vmul.f32 %v1346, %v1462
        %v1468 = vmul.f32 %v1347, %v1462
        %v1469 = vmul.f32 %v1348, %v1462
        %v1470 = vmul.f32 %v1349, %v1462
        %v1471 = vmul.f32 %v1350, %v1462
        %v1472 = vmul.f32 %v1351, %v1462
        %v1473 = vadd.f32 %v1271, %v1463
        %v1474 = vadd.f32 %v1272, %v1464
        %v1475 = vadd.f32 %v1273, %v1465
        %v1476 = vadd.f32 %v1274, %v1466
        %v1477 = vadd.f32 %v1275, %v1467
        %v1478 = vadd.f32 %v1276, %v1468
        %v1479 = vadd.f32 %v1277, %v1469
        %v1480 = vadd.f32 %v1278, %v1470
        %v1481 = vadd.f32 %v1279, %v1471
        %v1482 = vadd.f32 %v1280, %v1472
        %v1483 = vstv %s1461
        %v1484 = vmul.f32 %v1342, %v1483
        %v1485 = vmul.f32 %v1343, %v1483
        %v1486 = vmul.f32 %v1344, %v1483
        %v1487 = vmul.f32 %v1345, %v1483
        %v1488 = vmul.f32 %v1346, %v1483
        %v1489 = vmul.f32 %v1347, %v1483
        %v1490 = vmul.f32 %v1348, %v1483
        %v1491 = vmul.f32 %v1349, %v1483
        %v1492 = vmul.f32 %v1350, %v1483
        %v1493 = vmul.f32 %v1351, %v1483
        %v1494 = vadd.f32 %v1292, %v1484
        %v1495 = vadd.f32 %v1293, %v1485
        %v1496 = vadd.f32 %v1294, %v1486
        %v1497 = vadd.f32 %v1295, %v1487
        %v1498 = vadd.f32 %v1296, %v1488
        %v1499 = vadd.f32 %v1297, %v1489
        %v1500 = vadd.f32 %v1298, %v1490
        %v1501 = vadd.f32 %v1299, %v1491
        %v1502 = vadd.f32 %v1300, %v1492
        %v1503 = vadd.f32 %v1301, %v1493
        %vm1504 = vcmp.ge.s32.totalorder %v887, 48
        %vm1505 = vcmp.ge.s32.totalorder %v888, 48
        %vm1506 = vcmp.ge.s32.totalorder %v889, 48
        %vm1507 = vcmp.ge.s32.totalorder %v890, 48
        %vm1508 = vcmp.ge.s32.totalorder %v891, 48
        %vm1509 = vcmp.ge.s32.totalorder %v892, 48
        %vm1510 = vcmp.ge.s32.totalorder %v893, 48
        %vm1511 = vcmp.ge.s32.totalorder %v894, 48
        %vm1512 = vcmp.ge.s32.totalorder %v895, 48
        %vm1513 = vcmp.ge.s32.totalorder %v896, 48
        %vm1514 = vcmp.lt.s32.totalorder %v887, 80
        %vm1515 = vcmp.lt.s32.totalorder %v888, 80
        %vm1516 = vcmp.lt.s32.totalorder %v889, 80
        %vm1517 = vcmp.lt.s32.totalorder %v890, 80
        %vm1518 = vcmp.lt.s32.totalorder %v891, 80
        %vm1519 = vcmp.lt.s32.totalorder %v892, 80
        %vm1520 = vcmp.lt.s32.totalorder %v893, 80
        %vm1521 = vcmp.lt.s32.totalorder %v894, 80
        %vm1522 = vcmp.lt.s32.totalorder %v895, 80
        %vm1523 = vcmp.lt.s32.totalorder %v896, 80
        %vm1524 = vmand %vm1504, %vm1514
        %vm1525 = vmand %vm1505, %vm1515
        %vm1526 = vmand %vm1506, %vm1516
        %vm1527 = vmand %vm1507, %vm1517
        %vm1528 = vmand %vm1508, %vm1518
        %vm1529 = vmand %vm1509, %vm1519
        %vm1530 = vmand %vm1510, %vm1520
        %vm1531 = vmand %vm1511, %vm1521
        %vm1532 = vmand %vm1512, %vm1522
        %vm1533 = vmand %vm1513, %vm1523
        %v1534 = vsel %vm1524, 1, 0
        %v1535 = vsel %vm1525, 1, 0
        %v1536 = vsel %vm1526, 1, 0
        %v1537 = vsel %vm1527, 1, 0
        %v1538 = vsel %vm1528, 1, 0
        %v1539 = vsel %vm1529, 1, 0
        %v1540 = vsel %vm1530, 1, 0
        %v1541 = vsel %vm1531, 1, 0
        %v1542 = vsel %vm1532, 1, 0
        %v1543 = vsel %vm1533, 1, 0
        %v1544 = vcvt.s32.f32 %v1534
        %v1545 = vcvt.s32.f32 %v1535
        %v1546 = vcvt.s32.f32 %v1536
        %v1547 = vcvt.s32.f32 %v1537
        %v1548 = vcvt.s32.f32 %v1538
        %v1549 = vcvt.s32.f32 %v1539
        %v1550 = vcvt.s32.f32 %v1540
        %v1551 = vcvt.s32.f32 %v1541
        %v1552 = vcvt.s32.f32 %v1542
        %v1553 = vcvt.s32.f32 %v1543
        %v1554 = vmul.f32 %v818, %v1544
        %v1555 = vmul.f32 %v821, %v1545
        %v1556 = vmul.f32 %v824, %v1546
        %v1557 = vmul.f32 %v827, %v1547
        %v1558 = vmul.f32 %v830, %v1548
        %v1559 = vmul.f32 %v833, %v1549
        %v1560 = vmul.f32 %v836, %v1550
        %v1561 = vmul.f32 %v839, %v1551
        %v1562 = vmul.f32 %v842, %v1552
        %v1563 = vmul.f32 %v845, %v1553
        %v1564 = vsel %vm957, %v1554, 0.0
        %v1565 = vsel %vm957, %v1555, 0.0
        %v1566 = vadd.f32 %v1564, %v1565
        %v1567 = vsel %vm957, %v1556, 0.0
        %v1568 = vadd.f32 %v1566, %v1567
        %v1569 = vsel %vm957, %v1557, 0.0
        %v1570 = vadd.f32 %v1568, %v1569
        %v1571 = vsel %vm957, %v1558, 0.0
        %v1572 = vadd.f32 %v1570, %v1571
        %v1573 = vsel %vm957, %v1559, 0.0
        %v1574 = vadd.f32 %v1572, %v1573
        %v1575 = vsel %vm957, %v1560, 0.0
        %v1576 = vadd.f32 %v1574, %v1575
        %v1577 = vsel %vm957, %v1561, 0.0
        %v1578 = vadd.f32 %v1576, %v1577
        %v1579 = vsel %vm957, %v1562, 0.0
        %v1580 = vadd.f32 %v1578, %v1579
        %v1581 = vsel %vm957, %v1563, 0.0
        %v1582 = vadd.f32 %v1580, %v1581
        %1583 = vadd.xlane.f32.xlu0 %v1582
        %v1584 = vpop.xlane.xlu0 %1583
        %v1585 = vrot.slane %v1584, 4
        %v1586 = vadd.f32 %v1584, %v1585
        %v1587 = vrot.slane %v1586, 2
        %v1588 = vadd.f32 %v1586, %v1587
        %v1589 = vrot.slane %v1588, 1
        %v1590 = vadd.f32 %v1588, %v1589
        %s1591 = vtos %v1590
        %v1592 = vrcp.pop 2560.0
        %v1593 = vmul.f32 2560.0, %v1592
        %v1594 = vsub.f32 1.0, %v1593
        %v1595 = vmul.f32 %v1592, %v1594
        %v1596 = vadd.f32 %v1592, %v1595
        %vm1597 = vweird.f32 %v1592
        %v1598 = vsel %vm1597, %v1592, %v1596
        %s1599 = vtos %v1598
        %s1600 = smul.f32 %s1591, %s1599
        %v1601 = vmul.f32 %v858, %v1544
        %v1602 = vmul.f32 %v861, %v1545
        %v1603 = vmul.f32 %v864, %v1546
        %v1604 = vmul.f32 %v867, %v1547
        %v1605 = vmul.f32 %v870, %v1548
        %v1606 = vmul.f32 %v873, %v1549
        %v1607 = vmul.f32 %v876, %v1550
        %v1608 = vmul.f32 %v879, %v1551
        %v1609 = vmul.f32 %v882, %v1552
        %v1610 = vmul.f32 %v885, %v1553
        %v1611 = vsel %vm957, %v1601, 0.0
        %v1612 = vsel %vm957, %v1602, 0.0
        %v1613 = vadd.f32 %v1611, %v1612
        %v1614 = vsel %vm957, %v1603, 0.0
        %v1615 = vadd.f32 %v1613, %v1614
        %v1616 = vsel %vm957, %v1604, 0.0
        %v1617 = vadd.f32 %v1615, %v1616
        %v1618 = vsel %vm957, %v1605, 0.0
        %v1619 = vadd.f32 %v1617, %v1618
        %v1620 = vsel %vm957, %v1606, 0.0
        %v1621 = vadd.f32 %v1619, %v1620
        %v1622 = vsel %vm957, %v1607, 0.0
        %v1623 = vadd.f32 %v1621, %v1622
        %v1624 = vsel %vm957, %v1608, 0.0
        %v1625 = vadd.f32 %v1623, %v1624
        %v1626 = vsel %vm957, %v1609, 0.0
        %v1627 = vadd.f32 %v1625, %v1626
        %v1628 = vsel %vm957, %v1610, 0.0
        %v1629 = vadd.f32 %v1627, %v1628
        %1630 = vadd.xlane.f32.xlu0 %v1629
        %v1631 = vpop.xlane.xlu0 %1630
        %v1632 = vrot.slane %v1631, 4
        %v1633 = vadd.f32 %v1631, %v1632
        %v1634 = vrot.slane %v1633, 2
        %v1635 = vadd.f32 %v1633, %v1634
        %v1636 = vrot.slane %v1635, 1
        %v1637 = vadd.f32 %v1635, %v1636
        %s1638 = vtos %v1637
        %v1639 = vrcp.pop 2560.0
        %v1640 = vmul.f32 2560.0, %v1639
        %v1641 = vsub.f32 1.0, %v1640
        %v1642 = vmul.f32 %v1639, %v1641
        %v1643 = vadd.f32 %v1639, %v1642
        %vm1644 = vweird.f32 %v1639
        %v1645 = vsel %vm1644, %v1639, %v1643
        %s1646 = vtos %v1645
        %s1647 = smul.f32 %s1638, %s1646
        %s1648 = smul.f32 %s1600, %s1600
        %s1649 = ssub.f32 %s1647, %s1648
        %s1650 = smax.f32 %s1649, 0.0
        %s1651 = sadd.f32 %s1650, 1e-05
        %v1652 = vstv %s1651
        %v1653 = vrsqrt.pop %v1652
        %v1654 = vmul.f32 %v1653, %v1652
        %v1655 = vmul.f32 %v1654, %v1653
        %v1656 = vmul.f32 0.5, %v1655
        %v1657 = vsub.f32 1.5, %v1656
        %v1658 = vmul.f32 %v1653, %v1657
        %vm1659 = vweird.f32 %v1652
        %vm1660 = vweird.f32 %v1653
        %vm1661 = vmor %vm1659, %vm1660
        %v1662 = vsel %vm1661, %v1653, %v1658
        %s1663 = vtos %v1662
        %v1664 = vstv %s1600
        %v1665 = vmul.f32 %v1544, %v1664
        %v1666 = vmul.f32 %v1545, %v1664
        %v1667 = vmul.f32 %v1546, %v1664
        %v1668 = vmul.f32 %v1547, %v1664
        %v1669 = vmul.f32 %v1548, %v1664
        %v1670 = vmul.f32 %v1549, %v1664
        %v1671 = vmul.f32 %v1550, %v1664
        %v1672 = vmul.f32 %v1551, %v1664
        %v1673 = vmul.f32 %v1552, %v1664
        %v1674 = vmul.f32 %v1553, %v1664
        %v1675 = vadd.f32 %v1473, %v1665
        %v1676 = vadd.f32 %v1474, %v1666
        %v1677 = vadd.f32 %v1475, %v1667
        %v1678 = vadd.f32 %v1476, %v1668
        %v1679 = vadd.f32 %v1477, %v1669
        %v1680 = vadd.f32 %v1478, %v1670
        %v1681 = vadd.f32 %v1479, %v1671
        %v1682 = vadd.f32 %v1480, %v1672
        %v1683 = vadd.f32 %v1481, %v1673
        %v1684 = vadd.f32 %v1482, %v1674
        %v1685 = vstv %s1663
        %v1686 = vmul.f32 %v1544, %v1685
        %v1687 = vmul.f32 %v1545, %v1685
        %v1688 = vmul.f32 %v1546, %v1685
        %v1689 = vmul.f32 %v1547, %v1685
        %v1690 = vmul.f32 %v1548, %v1685
        %v1691 = vmul.f32 %v1549, %v1685
        %v1692 = vmul.f32 %v1550, %v1685
        %v1693 = vmul.f32 %v1551, %v1685
        %v1694 = vmul.f32 %v1552, %v1685
        %v1695 = vmul.f32 %v1553, %v1685
        %v1696 = vadd.f32 %v1494, %v1686
        %v1697 = vadd.f32 %v1495, %v1687
        %v1698 = vadd.f32 %v1496, %v1688
        %v1699 = vadd.f32 %v1497, %v1689
        %v1700 = vadd.f32 %v1498, %v1690
        %v1701 = vadd.f32 %v1499, %v1691
        %v1702 = vadd.f32 %v1500, %v1692
        %v1703 = vadd.f32 %v1501, %v1693
        %v1704 = vadd.f32 %v1502, %v1694
        %v1705 = vadd.f32 %v1503, %v1695
        %v1706 = vsub.f32 %v791, %v1675
        %v1707 = vsub.f32 %v793, %v1676
        %v1708 = vsub.f32 %v796, %v1677
        %v1709 = vsub.f32 %v798, %v1678
        %v1710 = vsub.f32 %v801, %v1679
        %v1711 = vsub.f32 %v803, %v1680
        %v1712 = vsub.f32 %v806, %v1681
        %v1713 = vsub.f32 %v808, %v1682
        %v1714 = vsub.f32 %v811, %v1683
        %v1715 = vsub.f32 %v813, %v1684
        %v1716 = vmul.f32 %v1706, %v1696
        %v1717 = vmul.f32 %v1707, %v1697
        %v1718 = vmul.f32 %v1708, %v1698
        %v1719 = vmul.f32 %v1709, %v1699
        %v1720 = vmul.f32 %v1710, %v1700
        %v1721 = vmul.f32 %v1711, %v1701
        %v1722 = vmul.f32 %v1712, %v1702
        %v1723 = vmul.f32 %v1713, %v1703
        %v1724 = vmul.f32 %v1714, %v1704
        %v1725 = vmul.f32 %v1715, %v1705
        %v1726 = vld [vmem:[#allocation8] sm:$0xf]
        %v1727 = vld [vmem:[#allocation8 + $0x4] sm:$0xf]
        %v1728 = vld [vmem:[#allocation8 + $0x8] sm:$0xf]
        %v1729 = vld [vmem:[#allocation8 + $0xc] sm:$0xf]
        %v1730 = vld [vmem:[#allocation8 + $0x10] sm:$0xf]
        %v1731 = vld [vmem:[#allocation8 + $0x14] sm:$0xf]
        %v1732 = vld [vmem:[#allocation8 + $0x18] sm:$0xf]
        %v1733 = vld [vmem:[#allocation8 + $0x1c] sm:$0xf]
        %v1734 = vld [vmem:[#allocation8 + $0x20] sm:$0xf]
        %v1735 = vld [vmem:[#allocation8 + $0x24] sm:$0xf]
        %v1736 = vsel %vm815, %v1716, -inf
        %1737 = vmax.xlane.f32.xlu0 %v1736
        %v1738 = vpop.xlane.xlu0 %1737
        %v1739 = vsel %vm815, %v1717, -inf
        %1740 = vmax.xlane.f32.xlu0 %v1739
        %v1741 = vpop.xlane.xlu0 %1740
        %v1742 = vsel %vm815, %v1718, -inf
        %1743 = vmax.xlane.f32.xlu0 %v1742
        %v1744 = vpop.xlane.xlu0 %1743
        %v1745 = vsel %vm815, %v1719, -inf
        %1746 = vmax.xlane.f32.xlu0 %v1745
        %v1747 = vpop.xlane.xlu0 %1746
        %v1748 = vsel %vm815, %v1720, -inf
        %1749 = vmax.xlane.f32.xlu0 %v1748
        %v1750 = vpop.xlane.xlu0 %1749
        %v1751 = vsel %vm815, %v1721, -inf
        %1752 = vmax.xlane.f32.xlu0 %v1751
        %v1753 = vpop.xlane.xlu0 %1752
        %v1754 = vsel %vm815, %v1722, -inf
        %1755 = vmax.xlane.f32.xlu0 %v1754
        %v1756 = vpop.xlane.xlu0 %1755
        %v1757 = vsel %vm815, %v1723, -inf
        %1758 = vmax.xlane.f32.xlu0 %v1757
        %v1759 = vpop.xlane.xlu0 %1758
        %v1760 = vsel %vm815, %v1724, -inf
        %1761 = vmax.xlane.f32.xlu0 %v1760
        %v1762 = vpop.xlane.xlu0 %1761
        %v1763 = vsel %vm815, %v1725, -inf
        %1764 = vmax.xlane.f32.xlu0 %v1763
        %v1765 = vpop.xlane.xlu0 %1764
        %v1766 = vsub.f32 %v1716, %v1738
        %v1767 = vsub.f32 %v1717, %v1741
        %v1768 = vsub.f32 %v1718, %v1744
        %v1769 = vsub.f32 %v1719, %v1747
        %v1770 = vsub.f32 %v1720, %v1750
        %v1771 = vsub.f32 %v1721, %v1753
        %v1772 = vsub.f32 %v1722, %v1756
        %v1773 = vsub.f32 %v1723, %v1759
        %v1774 = vsub.f32 %v1724, %v1762
        %v1775 = vsub.f32 %v1725, %v1765
        %v1776 = vmul.f32 %v1766, 1.442695
        %v1777 = vpow.pop %v1776
        %v1778 = vmul.f32 %v1767, 1.442695
        %v1779 = vpow.pop %v1778
        %v1780 = vmul.f32 %v1768, 1.442695
        %v1781 = vpow.pop %v1780
        %v1782 = vmul.f32 %v1769, 1.442695
        %v1783 = vpow.pop %v1782
        %v1784 = vmul.f32 %v1770, 1.442695
        %v1785 = vpow.pop %v1784
        %v1786 = vmul.f32 %v1771, 1.442695
        %v1787 = vpow.pop %v1786
        %v1788 = vmul.f32 %v1772, 1.442695
        %v1789 = vpow.pop %v1788
        %v1790 = vmul.f32 %v1773, 1.442695
        %v1791 = vpow.pop %v1790
        %v1792 = vmul.f32 %v1774, 1.442695
        %v1793 = vpow.pop %v1792
        %v1794 = vmul.f32 %v1775, 1.442695
        %v1795 = vpow.pop %v1794
        %v1796 = vsel %vm815, %v1777, 0.0
        %1797 = vadd.xlane.f32.xlu0 %v1796
        %v1798 = vpop.xlane.xlu0 %1797
        %v1799 = vsel %vm815, %v1779, 0.0
        %1800 = vadd.xlane.f32.xlu0 %v1799
        %v1801 = vpop.xlane.xlu0 %1800
        %v1802 = vsel %vm815, %v1781, 0.0
        %1803 = vadd.xlane.f32.xlu0 %v1802
        %v1804 = vpop.xlane.xlu0 %1803
        %v1805 = vsel %vm815, %v1783, 0.0
        %1806 = vadd.xlane.f32.xlu0 %v1805
        %v1807 = vpop.xlane.xlu0 %1806
        %v1808 = vsel %vm815, %v1785, 0.0
        %1809 = vadd.xlane.f32.xlu0 %v1808
        %v1810 = vpop.xlane.xlu0 %1809
        %v1811 = vsel %vm815, %v1787, 0.0
        %1812 = vadd.xlane.f32.xlu0 %v1811
        %v1813 = vpop.xlane.xlu0 %1812
        %v1814 = vsel %vm815, %v1789, 0.0
        %1815 = vadd.xlane.f32.xlu0 %v1814
        %v1816 = vpop.xlane.xlu0 %1815
        %v1817 = vsel %vm815, %v1791, 0.0
        %1818 = vadd.xlane.f32.xlu0 %v1817
        %v1819 = vpop.xlane.xlu0 %1818
        %v1820 = vsel %vm815, %v1793, 0.0
        %1821 = vadd.xlane.f32.xlu0 %v1820
        %v1822 = vpop.xlane.xlu0 %1821
        %v1823 = vsel %vm815, %v1795, 0.0
        %1824 = vadd.xlane.f32.xlu0 %v1823
        %v1825 = vpop.xlane.xlu0 %1824
        %v1826 = vrcp.pop %v1798
        %v1827 = vrcp.pop %v1801
        %v1828 = vrcp.pop %v1804
        %v1829 = vrcp.pop %v1807
        %v1830 = vrcp.pop %v1810
        %v1831 = vrcp.pop %v1813
        %v1832 = vrcp.pop %v1816
        %v1833 = vrcp.pop %v1819
        %v1834 = vrcp.pop %v1822
        %v1835 = vrcp.pop %v1825
        %v1836 = vmul.f32 %v1777, %v1826
        %v1837 = vmul.f32 %v1779, %v1827
        %v1838 = vmul.f32 %v1781, %v1828
        %v1839 = vmul.f32 %v1783, %v1829
        %v1840 = vmul.f32 %v1785, %v1830
        %v1841 = vmul.f32 %v1787, %v1831
        %v1842 = vmul.f32 %v1789, %v1832
        %v1843 = vmul.f32 %v1791, %v1833
        %v1844 = vmul.f32 %v1793, %v1834
        %v1845 = vmul.f32 %v1795, %v1835
        %v1846 = vpack.c.bf16 %v1837, %v1836
        %v1847 = vpack.c.bf16 %v1839, %v1838
        %v1848 = vpack.c.bf16 %v1841, %v1840
        %v1849 = vpack.c.bf16 %v1843, %v1842
        %v1850 = vpack.c.bf16 %v1845, %v1844
        %v1861 = vunpack.c.l.b16 %v1726
        %v1862 = vunpack.c.l.b16 %v1727
        %v1863 = vunpack.c.l.b16 %v1728
        %v1864 = vunpack.c.l.b16 %v1729
        %v1865 = vunpack.c.l.b16 %v1730
        %v1866 = vunpack.c.l.b16 %v1731
        %v1867 = vunpack.c.l.b16 %v1732
        %v1868 = vunpack.c.l.b16 %v1733
        %v1869 = vunpack.c.l.b16 %v1734
        %v1870 = vunpack.c.l.b16 %v1735
        %v1871 = vpack.c.b16 %v1862, %v1861
        %v1872 = vpack.c.b16 %v1864, %v1863
        %v1873 = vpack.c.b16 %v1866, %v1865
        %v1874 = vpack.c.b16 %v1868, %v1867
        %v1875 = vpack.c.b16 %v1870, %v1869
        %v1877 = vsel %vm815, %v1871, 0
        %v1880 = vsel %vm815, %v1872, 0
        %v1883 = vsel %vm815, %v1873, 0
        %v1886 = vsel %vm815, %v1874, 0
        %v1889 = vsel %vm815, %v1875, 0
        %1891 = vmatpush.bf16.msra.mxu0 0
        %1892 = vmatpush.bf16.msra.mxu0 0
        %1893 = vmatpush.bf16.msra.mxu0 0
        %1894 = vmatpush.bf16.msra.mxu0 %v1850
        %1895 = vmatpush.bf16.msra.mxu0 %v1849
        %1896 = vmatpush.bf16.msra.mxu0 %v1848
        %1897 = vmatpush.bf16.msra.mxu0 %v1847
        %1898 = vmatpush.bf16.msra.mxu0 %v1846
        %1899 = vmatmul.bf16.gmra.mxu0 %v1877
        %v1900 = vpop.f32.mrf.mxu0
        %v1901 = vadd.f32 0.0, %v1900
        %v1902 = vpop.f32.mrf.mxu0
        %v1903 = vadd.f32 0.0, %v1902
        %1904 = vmatmul.bf16.gmra.mxu0 %v1880
        %v1905 = vpop.f32.mrf.mxu0
        %v1906 = vadd.f32 0.0, %v1905
        %v1907 = vpop.f32.mrf.mxu0
        %v1908 = vadd.f32 0.0, %v1907
        %1909 = vmatmul.bf16.gmra.mxu0 %v1883
        %v1910 = vpop.f32.mrf.mxu0
        %v1911 = vadd.f32 0.0, %v1910
        %v1912 = vpop.f32.mrf.mxu0
        %v1913 = vadd.f32 0.0, %v1912
        %1914 = vmatmul.bf16.gmra.mxu0 %v1886
        %v1915 = vpop.f32.mrf.mxu0
        %v1916 = vadd.f32 0.0, %v1915
        %v1917 = vpop.f32.mrf.mxu0
        %v1918 = vadd.f32 0.0, %v1917
        %1919 = vmatmul.bf16.gmra.mxu0 %v1889
        %v1920 = vpop.f32.mrf.mxu0
        %v1921 = vadd.f32 0.0, %v1920
        %v1922 = vpop.f32.mrf.mxu0
        %v1923 = vadd.f32 0.0, %v1922
        %1924 = vdwg.mxu0
        %v1925 = vpack.c.bf16 %v1903, %v1901
        %v1926 = vpack.c.bf16 %v1908, %v1906
        %v1927 = vpack.c.bf16 %v1913, %v1911
        %v1928 = vpack.c.bf16 %v1918, %v1916
        %v1929 = vpack.c.bf16 %v1923, %v1921
        %v1930 = vld [vmem:[%s275] sm:$0xff]
        %v1931 = vld [vmem:[%s275 + $0x8] sm:$0xff]
        %v1932 = vld [vmem:[%s275 + $0x10] sm:$0xff]
        %v1933 = vld [vmem:[%s275 + $0x18] sm:$0xff]
        %v1934 = vld [vmem:[%s275 + $0x20] sm:$0xff]
        %v1935 = vld [vmem:[%s275 + $0x28] sm:$0xff]
        %v1936 = vld [vmem:[%s275 + $0x30] sm:$0xff]
        %v1937 = vld [vmem:[%s275 + $0x38] sm:$0xff]
        %v1938 = vld [vmem:[%s275 + $0x40] sm:$0xff]
        %v1939 = vld [vmem:[%s275 + $0x48] sm:$0xff]
        %v1950 = vunpack.c.l.b16 %v1930
        %v1951 = vunpack.c.h.b16 %v1930
        %v1952 = vunpack.c.l.b16 %v1931
        %v1953 = vunpack.c.h.b16 %v1931
        %v1954 = vunpack.c.l.b16 %v1932
        %v1955 = vunpack.c.h.b16 %v1932
        %v1956 = vunpack.c.l.b16 %v1933
        %v1957 = vunpack.c.h.b16 %v1933
        %v1958 = vunpack.c.l.b16 %v1934
        %v1959 = vunpack.c.h.b16 %v1934
        %v1960 = vunpack.c.l.b16 %v1935
        %v1961 = vunpack.c.h.b16 %v1935
        %v1962 = vunpack.c.l.b16 %v1936
        %v1963 = vunpack.c.h.b16 %v1936
        %v1964 = vunpack.c.l.b16 %v1937
        %v1965 = vunpack.c.h.b16 %v1937
        %v1966 = vunpack.c.l.b16 %v1938
        %v1967 = vunpack.c.h.b16 %v1938
        %v1968 = vunpack.c.l.b16 %v1939
        %v1969 = vunpack.c.h.b16 %v1939
        %v1970 = vpack.c.b16 %v1952, %v1950
        %v1971 = vpack.c.b16 %v1953, %v1951
        %v1972 = vpack.c.b16 %v1956, %v1954
        %v1973 = vpack.c.b16 %v1957, %v1955
        %v1974 = vpack.c.b16 %v1960, %v1958
        %v1975 = vpack.c.b16 %v1961, %v1959
        %v1976 = vpack.c.b16 %v1964, %v1962
        %v1977 = vpack.c.b16 %v1965, %v1963
        %v1978 = vpack.c.b16 %v1968, %v1966
        %v1979 = vpack.c.b16 %v1969, %v1967
        %v1991 = vsel %vm815, %v1925, 0
        %v1994 = vsel %vm815, %v1926, 0
        %v1997 = vsel %vm815, %v1927, 0
        %v2000 = vsel %vm815, %v1928, 0
        %v2003 = vsel %vm815, %v1929, 0
        %2005 = vmatpush.bf16.msra.mxu0 0
        %2006 = vmatpush.bf16.msra.mxu0 0
        %2007 = vmatpush.bf16.msra.mxu0 0
        %2008 = vmatpush.bf16.msra.mxu0 %v1978
        %2009 = vmatpush.bf16.msra.mxu0 %v1976
        %2010 = vmatpush.bf16.msra.mxu0 %v1974
        %2011 = vmatpush.bf16.msra.mxu0 %v1972
        %2012 = vmatpush.bf16.msra.mxu0 %v1970
        %2013 = vmatmul.bf16.gmra.mxu0 %v1991
        %v2014 = vpop.f32.mrf.mxu0
        %v2015 = vadd.f32 0.0, %v2014
        %v2016 = vpop.f32.mrf.mxu0
        %v2017 = vadd.f32 0.0, %v2016
        %2018 = vmatmul.bf16.gmra.mxu0 %v1994
        %v2019 = vpop.f32.mrf.mxu0
        %v2020 = vadd.f32 0.0, %v2019
        %v2021 = vpop.f32.mrf.mxu0
        %v2022 = vadd.f32 0.0, %v2021
        %2023 = vmatmul.bf16.gmra.mxu0 %v1997
        %v2024 = vpop.f32.mrf.mxu0
        %v2025 = vadd.f32 0.0, %v2024
        %v2026 = vpop.f32.mrf.mxu0
        %v2027 = vadd.f32 0.0, %v2026
        %2028 = vmatmul.bf16.gmra.mxu0 %v2000
        %v2029 = vpop.f32.mrf.mxu0
        %v2030 = vadd.f32 0.0, %v2029
        %v2031 = vpop.f32.mrf.mxu0
        %v2032 = vadd.f32 0.0, %v2031
        %2033 = vmatmul.bf16.gmra.mxu0 %v2003
        %v2034 = vpop.f32.mrf.mxu0
        %v2035 = vadd.f32 0.0, %v2034
        %v2036 = vpop.f32.mrf.mxu0
        %v2037 = vadd.f32 0.0, %v2036
        %2038 = vdwg.mxu0
        %2039 = vmatpush.bf16.msra.mxu0 0
        %2040 = vmatpush.bf16.msra.mxu0 0
        %2041 = vmatpush.bf16.msra.mxu0 0
        %2042 = vmatpush.bf16.msra.mxu0 %v1979
        %2043 = vmatpush.bf16.msra.mxu0 %v1977
        %2044 = vmatpush.bf16.msra.mxu0 %v1975
        %2045 = vmatpush.bf16.msra.mxu0 %v1973
        %2046 = vmatpush.bf16.msra.mxu0 %v1971
        %2047 = vmatmul.bf16.gmra.mxu0 %v1991
        %v2048 = vpop.f32.mrf.mxu0
        %v2049 = vadd.f32 0.0, %v2048
        %v2050 = vpop.f32.mrf.mxu0
        %v2051 = vadd.f32 0.0, %v2050
        %2052 = vmatmul.bf16.gmra.mxu0 %v1994
        %v2053 = vpop.f32.mrf.mxu0
        %v2054 = vadd.f32 0.0, %v2053
        %v2055 = vpop.f32.mrf.mxu0
        %v2056 = vadd.f32 0.0, %v2055
        %2057 = vmatmul.bf16.gmra.mxu0 %v1997
        %v2058 = vpop.f32.mrf.mxu0
        %v2059 = vadd.f32 0.0, %v2058
        %v2060 = vpop.f32.mrf.mxu0
        %v2061 = vadd.f32 0.0, %v2060
        %2062 = vmatmul.bf16.gmra.mxu0 %v2000
        %v2063 = vpop.f32.mrf.mxu0
        %v2064 = vadd.f32 0.0, %v2063
        %v2065 = vpop.f32.mrf.mxu0
        %v2066 = vadd.f32 0.0, %v2065
        %2067 = vmatmul.bf16.gmra.mxu0 %v2003
        %v2068 = vpop.f32.mrf.mxu0
        %v2069 = vadd.f32 0.0, %v2068
        %v2070 = vpop.f32.mrf.mxu0
        %v2071 = vadd.f32 0.0, %v2070
        %2072 = vdwg.mxu0
        %2073 = vst [vmem:[%s315] sm:$0xff] %v2015
        %2074 = vst [vmem:[%s315 + $0x8] sm:$0xff] %v2049
        %2075 = vst [vmem:[%s315 + $0x10] sm:$0xff] %v2017
        %2076 = vst [vmem:[%s315 + $0x18] sm:$0xff] %v2051
        %2077 = vst [vmem:[%s315 + $0x20] sm:$0xff] %v2020
        %2078 = vst [vmem:[%s315 + $0x28] sm:$0xff] %v2054
        %2079 = vst [vmem:[%s315 + $0x30] sm:$0xff] %v2022
        %2080 = vst [vmem:[%s315 + $0x38] sm:$0xff] %v2056
        %2081 = vst [vmem:[%s315 + $0x40] sm:$0xff] %v2025
        %2082 = vst [vmem:[%s315 + $0x48] sm:$0xff] %v2059
        %2083 = vst [vmem:[%s315 + $0x50] sm:$0xff] %v2027
        %2084 = vst [vmem:[%s315 + $0x58] sm:$0xff] %v2061
        %2085 = vst [vmem:[%s315 + $0x60] sm:$0xff] %v2030
        %2086 = vst [vmem:[%s315 + $0x68] sm:$0xff] %v2064
        %2087 = vst [vmem:[%s315 + $0x70] sm:$0xff] %v2032
        %2088 = vst [vmem:[%s315 + $0x78] sm:$0xff] %v2066
        %2089 = vst [vmem:[%s315 + $0x80] sm:$0xff] %v2035
        %2090 = vst [vmem:[%s315 + $0x88] sm:$0xff] %v2069
        %2091 = vst [vmem:[%s315 + $0x90] sm:$0xff] %v2037
        %2092 = vst [vmem:[%s315 + $0x98] sm:$0xff] %v2071
        %s2093 = sand.u32 %s132, 1
        %s2094 = scalar_lea.sflag [#allocation4], %s2093
        %s2095 = sand.u32 %s132, 1
        %s2096 = smul.addr %s2095, 160
        %s2097 = scalar_lea.vmem [#allocation10], %s2096
        // Predicated region
        $region53: #{tpu_custom_call.1} parent=35 // pred_check
          %p2098 = pneg %p142
        $region54: #{tpu_custom_call.1} parent=35 // pred_check_branch
          %2100 = sbr.rel (%p2098) target = $region56
        $region55: #{tpu_custom_call.1} parent=35 // pred_region
          %2102 = vsyncadd %s2094, 0
          %s2103 = smul.addr %s25, 20
          %s2104 = smul.addr %s2103, 8
          %s2105 = scalar_lea.hbm %s4, %s2104
          %s2106 = sshll.u32 %s2097, 4
          %s2107 = int_to_ptr.vmem [resolvable:$true] %s2106
          %s2108 = sshll.u32 %s2105, 4
          %s2109 = int_to_ptr.hbm [resolvable:$true] %s2108
          %2114 = dma.vmem_to_hbm [thread:$0]  %s2107, 2560, %s2109, %s2094, 256, 256, 16
        $region56: #{tpu_custom_call.1} parent=35 // pred_fallthru
          _
      $region36: #{tpu_custom_call.1} parent=5 // pred_fallthru
        _
      %p2115 = scmp.le.s32.totalorder 2, %s20
      // Predicated region
      $region57: #{tpu_custom_call.1} parent=5 // pred_check
        %p2116 = pneg %p2115
      $region58: #{tpu_custom_call.1} parent=5 // pred_check_branch
        %2118 = sbr.rel (%p2116) target = $region60
      $region59: #{tpu_custom_call.1} parent=5 // pred_region
        %s2119 = ssub.s32 %s20, 2
        // Predicated region
        $region61: #{tpu_custom_call.1} parent=59 // pred_check
          %p2120 = pneg %p148
        $region62: #{tpu_custom_call.1} parent=59 // pred_check_branch
          %2122 = sbr.rel (%p2120) target = $region64
        $region63: #{tpu_custom_call.1} parent=59 // pred_region
          %s2123 = sand.u32 %s133, 1
          %s2124 = scalar_lea.sflag [#allocation4], %s2123
          %s2125 = sand.u32 %s133, 1
          %s2126 = smul.addr %s2125, 160
          %s2127 = scalar_lea.vmem [#allocation10], %s2126
          %2129 = dma.done %s2124, 2560
        $region64: #{tpu_custom_call.1} parent=59 // pred_fallthru
          _
      $region60: #{tpu_custom_call.1} parent=5 // pred_fallthru
        _
    $region6: #{tpu_custom_call.1} parent=1 // loop_footer
      %s24 = sadd.s32 1, %s20
    $region7: #{tpu_custom_call.1} parent=1 // loop_footer_branch
      %19 = sbr.rel target = $region3
    $region8: #{tpu_custom_call.1} parent=1 // loop_exit
      _
    %2130 = vsyncpa [#allocation3], 1
    %s2131 = scalar_lea.sflag [#allocation3], 1
    %2132 = vsyncpa %s2131, 1
    %2133 = vsyncpa [#allocation6], 1
    %s2134 = scalar_lea.sflag [#allocation6], 1
    %2135 = vsyncpa %s2134, 1
    %2136 = vsyncpa [#allocation9], 1
    %2137 = vsyncpa [#allocation4], 1
    %s2138 = scalar_lea.sflag [#allocation4], 1
    %2139 = vsyncpa %s2138, 1

</llo_original>
